<compile_context>
chip_gen: v6e
topology: v6e:2x2x1
jax: 0.10.0
libtpu: 0.0.40
codegen_flags: <defaults>
</compile_context>

<pallas_src>
import math

import jax
import jax.numpy as jnp
from jax.experimental import pallas as pl
from jax.experimental.pallas import tpu as pltpu

# ----- module hyperparameters (small, synthetic) ---------------------------
EMBED_DIM = 32          # embedDimension
NUM_NEURONS = 64        # numNeurons
HIDDEN = 512            # refinement2 hidden width (fixed in module)
SEQ_LEN = 8             # tokens in _inputEmbeds
NUM_TOKENS_PER_STEP = 8
ALL_WINDOW_SIZES = (1.0, 2.0, 4.0, 8.0)   # allWindowSizes_new
NUM_WINDOWS = len(ALL_WINDOW_SIZES)
EPS = 1e-5              # torch LayerNorm default eps

BATCH = 16              # independent module invocations fused into one call
                        # (launch/DMA-bound kernel: callers should batch as
                        #  many forwards as possible per pallas_call)


# ----- shared math helpers (traced inside the kernel too) ------------------
def _gelu_exact(x):
    # torch.nn.functional.gelu default (erf form)
    return 0.5 * x * (1.0 + jax.lax.erf(x * (1.0 / math.sqrt(2.0))))


def _layernorm(x, g, b):
    mu = jnp.mean(x, axis=-1, keepdims=True)
    var = jnp.mean((x - mu) ** 2, axis=-1, keepdims=True)
    return (x - mu) * jax.lax.rsqrt(var + EPS) * g + b


# ----- Pallas kernel --------------------------------------------------------
# pack buffer layout ([8, 512] f32; every slice is statically offset):
#   row 0: ln1_g @ [0:32], ln1_b @ [128:160], nb_scaled @ [256:320], r2_b @ [384:448]
#   row 1: ln3_g @ [0:64], ln3_b @ [128:192]
#   row 2: r1_b (512) | row 3: ln2_g (512) | row 4: ln2_b (512)
# wbuf buffer layout ([32+B, B*S] bf16):
#   rows 0:32,  cols 0:64   -> wT  (neuron weights, pre-clipped, pre-scaled, transposed)
#   rows 32:32+B, all cols  -> Wsel (block-diag folded window/cerebellum weights)
def inn_kernel(x_ref, wbuf_ref, pack_ref, r1wT_ref, r2wT_ref, out_ref):
    D, N = EMBED_DIM, NUM_NEURONS
    B = out_ref.shape[0]

    ln1_g = pack_ref[0:1, 0:D]
    ln1_b = pack_ref[0:1, 128:128 + D]
    nb    = pack_ref[0:1, 256:256 + N]          # already scaled by 1/sqrt(D)
    r2_b  = pack_ref[0:1, 384:384 + N]
    ln3_g = pack_ref[1:2, 0:N]
    ln3_b = pack_ref[1:2, 128:128 + N]
    r1_b  = pack_ref[2:3, :]
    ln2_g = pack_ref[3:4, :]
    ln2_b = pack_ref[4:5, :]

    wT   = wbuf_ref[0:D, 0:N]                   # [D, N]   bf16
    wsel = wbuf_ref[D:D + B, :]                 # [B, B*S] bf16

    x = x_ref[...]                              # [B*S, D] f32

    # --- NEURON: LayerNorm -> batched dot (weights pre-clipped & pre-scaled) -> GELU
    normed = _layernorm(x, ln1_g, ln1_b)
    raw = jnp.dot(normed.astype(jnp.bfloat16), wT,
                  preferred_element_type=jnp.float32) + nb
    act = _gelu_exact(raw)                      # [B*S, N]  neuronActsPerToken

    # --- folded stackedWindowMeans + cerebellum combine:
    #     combined[b] = sum_s w_seq[s] * act[b*S + s]   (block-diag Wsel matmul)
    combined = jnp.dot(wsel, act.astype(jnp.bfloat16),
                       preferred_element_type=jnp.float32)          # [B, N]

    # --- refinement2: Linear -> GELU -> LayerNorm -> Linear -> LayerNorm
    h = jnp.dot(combined.astype(jnp.bfloat16), r1wT_ref[...],
                preferred_element_type=jnp.float32) + r1_b
    h = _gelu_exact(h)
    h = _layernorm(h, ln2_g, ln2_b)
    h2 = jnp.dot(h.astype(jnp.bfloat16), r2wT_ref[...],
                 preferred_element_type=jnp.float32) + r2_b
    out_ref[...] = _layernorm(h2, ln3_g, ln3_b)                     # [B, N]


# ----- JAX glue: parameter init + scalar window bookkeeping -----------------
def init_params(key):
    k1, k2, k3, k4, k5 = jax.random.split(key, 5)
    params = {
        # NEURON
        "n_weights": jax.random.normal(k1, (NUM_NEURONS, EMBED_DIM), jnp.float32) * 0.01,
        "n_biases": jnp.zeros((NUM_NEURONS,), jnp.float32),
        "ln1_g": jnp.ones((EMBED_DIM,), jnp.float32),
        "ln1_b": jnp.zeros((EMBED_DIM,), jnp.float32),
        # INN
        "cerebellum": jnp.ones((NUM_WINDOWS,), jnp.float32),
        "windowFractionality": jnp.full((NUM_WINDOWS,), -6.0, jnp.float32),
        "logWindowSizes": jnp.log(jnp.asarray(ALL_WINDOW_SIZES, jnp.float32)),
        # refinement2
        "r1_w": jax.random.uniform(k2, (HIDDEN, NUM_NEURONS), jnp.float32,
                                   -1.0 / math.sqrt(NUM_NEURONS),
                                   1.0 / math.sqrt(NUM_NEURONS)),
        "r1_b": jax.random.uniform(k3, (HIDDEN,), jnp.float32,
                                   -1.0 / math.sqrt(NUM_NEURONS),
                                   1.0 / math.sqrt(NUM_NEURONS)),
        "ln2_g": jnp.ones((HIDDEN,), jnp.float32),
        "ln2_b": jnp.zeros((HIDDEN,), jnp.float32),
        "r2_w": jax.random.uniform(k4, (NUM_NEURONS, HIDDEN), jnp.float32,
                                   -1.0 / math.sqrt(HIDDEN),
                                   1.0 / math.sqrt(HIDDEN)),
        "r2_b": jax.random.uniform(k5, (NUM_NEURONS,), jnp.float32,
                                   -1.0 / math.sqrt(HIDDEN),
                                   1.0 / math.sqrt(HIDDEN)),
        "ln3_g": jnp.ones((NUM_NEURONS,), jnp.float32),
        "ln3_b": jnp.zeros((NUM_NEURONS,), jnp.float32),
    }
    return params


def _window_glue(params):
    """Scalar math on length-NUM_WINDOWS vectors (glue, not the hot path)."""
    frac = jax.nn.sigmoid(params["windowFractionality"])
    clamped_log = jnp.tanh(params["logWindowSizes"] / 2.0) * 1.5
    scaled_tanh = (jnp.tanh(clamped_log) + 1.0) / 2.0
    min_w, max_w = 0.1, float(NUM_TOKENS_PER_STEP)
    float_ws = min_w + (max_w - min_w) * scaled_tanh
    int_ws = jnp.maximum(jnp.round(float_ws), 1.0)
    window_tensor = (1.0 - frac) * int_ws + frac * float_ws            # [W]
    window_sizes = jnp.clip(jnp.ceil(window_tensor), 1.0,
                            float(NUM_TOKENS_PER_STEP)).astype(jnp.int32)
    start_idx = NUM_TOKENS_PER_STEP - window_sizes                     # [W]
    idx = jnp.arange(NUM_TOKENS_PER_STEP, dtype=jnp.int32)[None, :]
    mask = (idx >= start_idx[:, None]).astype(jnp.float32)             # [W, maxLen]
    sig = jax.nn.sigmoid(params["cerebellum"])
    clamped = jnp.maximum(sig, 0.0001)
    csoft = clamped / jnp.sum(clamped)                                  # [W]
    return window_tensor, start_idx, mask, csoft


def _prepare_kernel_inputs(params, batch):
    """Pure parameter math, hoisted out of the kernel (amortizable)."""
    # --- NEURON weight-norm clip + fold 1/sqrt(D) into weights & bias
    w = params["n_weights"]
    wn = jnp.sqrt(jnp.sum(w * w, axis=1, keepdims=True))
    w = w / jnp.clip(wn, 1.0, 100.0)
    inv_scale = 1.0 / math.sqrt(EMBED_DIM)
    wT_scaled = (w * inv_scale).T                                      # [D, N]
    nb_scaled = params["n_biases"] * inv_scale                         # [N]

    # --- fold window means / cerebellum softmax into one per-token weight
    # combined = sum_w csoft[w]/wt[w] * (mask[w] @ padded) = ((csoft/wt)@mask) @ padded
    window_tensor, _, mask, csoft = _window_glue(params)
    w_pad = (csoft / window_tensor) @ mask                             # [maxLen]
    t = min(SEQ_LEN, NUM_TOKENS_PER_STEP)
    w_seq = jnp.zeros((SEQ_LEN,), jnp.float32)
    # padded row (maxLen - t + j) holds token (SEQ_LEN - t + j); missing rows are 0.
    w_seq = w_seq.at[SEQ_LEN - t:].set(w_pad[NUM_TOKENS_PER_STEP - t:])

    # block-diagonal selection matrix: Wsel[b, b*S + s] = w_seq[s]
    wsel = jnp.kron(jnp.eye(batch, dtype=jnp.float32), w_seq[None, :])  # [B, B*S]

    # --- merge wT + Wsel into ONE lane-dense bf16 buffer (single DMA)
    cols = batch * SEQ_LEN
    assert cols >= NUM_NEURONS
    wbuf = jnp.zeros((EMBED_DIM + batch, cols), jnp.float32)
    wbuf = wbuf.at[0:EMBED_DIM, 0:NUM_NEURONS].set(wT_scaled)
    wbuf = wbuf.at[EMBED_DIM:EMBED_DIM + batch, :].set(wsel)
    wbuf = wbuf.astype(jnp.bfloat16)

    # --- pack all small [1,K] vectors into one [8, 512] f32 buffer
    pack = jnp.zeros((8, 512), jnp.float32)
    pack = pack.at[0, 0:EMBED_DIM].set(params["ln1_g"])
    pack = pack.at[0, 128:128 + EMBED_DIM].set(params["ln1_b"])
    pack = pack.at[0, 256:256 + NUM_NEURONS].set(nb_scaled)
    pack = pack.at[0, 384:384 + NUM_NEURONS].set(params["r2_b"])
    pack = pack.at[1, 0:NUM_NEURONS].set(params["ln3_g"])
    pack = pack.at[1, 128:128 + NUM_NEURONS].set(params["ln3_b"])
    pack = pack.at[2, :].set(params["r1_b"])
    pack = pack.at[3, :].set(params["ln2_g"])
    pack = pack.at[4, :].set(params["ln2_b"])

    r1wT = params["r1_w"].T.astype(jnp.bfloat16)                       # [N, 512]
    r2wT = params["r2_w"].T.astype(jnp.bfloat16)                       # [512, N]
    return wbuf, pack, r1wT, r2wT


def interneuron_network_forward(x_batch, params):
    """x_batch: [B, S, D] -> [B, NUM_NEURONS] (B independent module forwards)."""
    B, S, D = x_batch.shape
    assert S == SEQ_LEN and D == EMBED_DIM
    wbuf, pack, r1wT, r2wT = _prepare_kernel_inputs(params, B)

    x_flat = x_batch.reshape(B * S, D)                                 # [B*S, D]
    rows = B * S

    return pl.pallas_call(
        inn_kernel,
        out_shape=jax.ShapeDtypeStruct((B, NUM_NEURONS), jnp.float32),
        grid=(1,),   # single step: latency-bound kernel, no grid overhead
        in_specs=[
            pl.BlockSpec((rows, EMBED_DIM), lambda i: (0, 0)),          # x
            pl.BlockSpec((EMBED_DIM + B, rows), lambda i: (0, 0)),      # wT + Wsel (bf16)
            pl.BlockSpec((8, 512), lambda i: (0, 0)),                   # param pack (f32)
            pl.BlockSpec((NUM_NEURONS, HIDDEN), lambda i: (0, 0)),      # r1wT (bf16)
            pl.BlockSpec((HIDDEN, NUM_NEURONS), lambda i: (0, 0)),      # r2wT (bf16)
        ],
        out_specs=pl.BlockSpec((B, NUM_NEURONS), lambda i: (0, 0)),
        compiler_params=pltpu.CompilerParams(
            dimension_semantics=("arbitrary",)),
    )(x_flat, wbuf, pack, r1wT, r2wT)


# ----- pure-JAX reference (mirrors the torch code, cumsum form, f32) --------
def reference_forward(x, params):
    w = params["n_weights"]
    wn = jnp.sqrt(jnp.sum(w * w, axis=1, keepdims=True))
    w = w / jnp.clip(wn, 1.0, 100.0)
    normed = _layernorm(x, params["ln1_g"], params["ln1_b"])
    raw = (normed @ w.T + params["n_biases"]) / math.sqrt(EMBED_DIM)
    act = _gelu_exact(raw)

    window_tensor, start_idx, _, csoft = _window_glue(params)
    max_len = NUM_TOKENS_PER_STEP
    padded = jnp.zeros((max_len, NUM_NEURONS), jnp.float32)
    tail = act[-max_len:]
    padded = padded.at[max_len - tail.shape[0]:].set(tail)
    cumsum = jnp.concatenate([jnp.zeros((1, NUM_NEURONS), jnp.float32), padded],
                             axis=0).cumsum(axis=0)
    sums = cumsum[max_len][None, :] - cumsum[start_idx]
    means = sums / window_tensor[:, None]
    combined = jnp.sum(means * csoft[:, None], axis=0, keepdims=True)

    h = _gelu_exact(combined @ params["r1_w"].T + params["r1_b"])
    h = _layernorm(h, params["ln2_g"], params["ln2_b"])
    h2 = h @ params["r2_w"].T + params["r2_b"]
    return _layernorm(h2, params["ln3_g"], params["ln3_b"])


if __name__ == "__main__":
    key = jax.random.PRNGKey(0)
    kx, kp = jax.random.split(key)
    x = jax.random.normal(kx, (BATCH, SEQ_LEN, EMBED_DIM), jnp.float32)
    params = init_params(kp)

    out = interneuron_network_forward(x, params)
    out = jax.block_until_ready(out)

    ref = jax.vmap(lambda xi: reference_forward(xi, params)[0])(x)     # [B, N]
    ref = jax.block_until_ready(ref)

    assert out.shape == (BATCH, NUM_NEURONS)
    # Tolerance loosened for bf16 MXU operands (f32 accumulation); a structural
    # bug would produce O(1) mismatches, well above this threshold.
    assert jnp.allclose(out, ref, rtol=5e-2, atol=5e-2), (
        f"mismatch: max abs diff {jnp.max(jnp.abs(out - ref))}")
    print("KERNEL_OK")
</pallas_src>

<mosaic_0001>
module attributes {stable_mosaic.version = 11 : i64} {
  func.func @inn_kernel(%arg0: i32, %arg1: memref<128x32xf32, #tpu.memory_space<vmem>>, %arg2: memref<48x128xbf16, #tpu.memory_space<vmem>>, %arg3: memref<8x512xf32, #tpu.memory_space<vmem>>, %arg4: memref<64x512xbf16, #tpu.memory_space<vmem>>, %arg5: memref<512x64xbf16, #tpu.memory_space<vmem>>, %arg6: memref<16x64xf32, #tpu.memory_space<vmem>>) attributes {dimension_semantics = [#tpu.dimension_semantics<arbitrary>], iteration_bounds = array<i64: 1>, scalar_prefetch = 0 : i64, scratch_operands = 0 : i64, tpu.core_type = #tpu.core_type<tc>, window_params = [{pipeline_mode = #tpu.pipeline_mode<synchronous>, transform_indices = @transform_0, window_bounds = array<i64: 128, 32>}, {pipeline_mode = #tpu.pipeline_mode<synchronous>, transform_indices = @transform_1, window_bounds = array<i64: 48, 128>}, {pipeline_mode = #tpu.pipeline_mode<synchronous>, transform_indices = @transform_2, window_bounds = array<i64: 8, 512>}, {pipeline_mode = #tpu.pipeline_mode<synchronous>, transform_indices = @transform_3, window_bounds = array<i64: 64, 512>}, {pipeline_mode = #tpu.pipeline_mode<synchronous>, transform_indices = @transform_4, window_bounds = array<i64: 512, 64>}, {pipeline_mode = #tpu.pipeline_mode<synchronous>, transform_indices = @transform_5, window_bounds = array<i64: 16, 64>}]} {
    %c0 = arith.constant 0 : index
    %c0_0 = arith.constant 0 : index
    %0 = vector.load %arg3[%c0, %c0_0] : memref<8x512xf32, #tpu.memory_space<vmem>>, vector<1x32xf32>
    %c0_1 = arith.constant 0 : index
    %c128 = arith.constant 128 : index
    %1 = vector.load %arg3[%c0_1, %c128] : memref<8x512xf32, #tpu.memory_space<vmem>>, vector<1x32xf32>
    %c0_2 = arith.constant 0 : index
    %c256 = arith.constant 256 : index
    %2 = vector.load %arg3[%c0_2, %c256] : memref<8x512xf32, #tpu.memory_space<vmem>>, vector<1x64xf32>
    %c0_3 = arith.constant 0 : index
    %c384 = arith.constant 384 : index
    %3 = vector.load %arg3[%c0_3, %c384] : memref<8x512xf32, #tpu.memory_space<vmem>>, vector<1x64xf32>
    %c1 = arith.constant 1 : index
    %c0_4 = arith.constant 0 : index
    %4 = vector.load %arg3[%c1, %c0_4] : memref<8x512xf32, #tpu.memory_space<vmem>>, vector<1x64xf32>
    %c1_5 = arith.constant 1 : index
    %c128_6 = arith.constant 128 : index
    %5 = vector.load %arg3[%c1_5, %c128_6] : memref<8x512xf32, #tpu.memory_space<vmem>>, vector<1x64xf32>
    %c2 = arith.constant 2 : index
    %c0_7 = arith.constant 0 : index
    %6 = vector.load %arg3[%c2, %c0_7] : memref<8x512xf32, #tpu.memory_space<vmem>>, vector<1x512xf32>
    %c3 = arith.constant 3 : index
    %c0_8 = arith.constant 0 : index
    %7 = vector.load %arg3[%c3, %c0_8] : memref<8x512xf32, #tpu.memory_space<vmem>>, vector<1x512xf32>
    %c4 = arith.constant 4 : index
    %c0_9 = arith.constant 0 : index
    %8 = vector.load %arg3[%c4, %c0_9] : memref<8x512xf32, #tpu.memory_space<vmem>>, vector<1x512xf32>
    %c0_10 = arith.constant 0 : index
    %c0_11 = arith.constant 0 : index
    %9 = vector.load %arg2[%c0_10, %c0_11] : memref<48x128xbf16, #tpu.memory_space<vmem>>, vector<32x64xbf16>
    %c32 = arith.constant 32 : index
    %c0_12 = arith.constant 0 : index
    %10 = vector.load %arg2[%c32, %c0_12] : memref<48x128xbf16, #tpu.memory_space<vmem>>, vector<16x128xbf16>
    %c0_13 = arith.constant 0 : index
    %c0_14 = arith.constant 0 : index
    %11 = vector.load %arg1[%c0_13, %c0_14] : memref<128x32xf32, #tpu.memory_space<vmem>>, vector<128x32xf32>
    %cst = arith.constant dense<0.000000e+00> : vector<128xf32>
    %12 = vector.multi_reduction <add>, %11, %cst [1] : vector<128x32xf32> to vector<128xf32>
    %13 = vector.shape_cast %12 : vector<128xf32> to vector<128x1xf32>
    %cst_15 = arith.constant 3.200000e+01 : f32
    %14 = vector.broadcast %cst_15 : f32 to vector<128x1xf32>
    %15 = arith.divf %13, %14 : vector<128x1xf32>
    %16 = vector.broadcast %15 : vector<128x1xf32> to vector<128x32xf32>
    %17 = arith.subf %11, %16 : vector<128x32xf32>
    %18 = arith.mulf %17, %17 : vector<128x32xf32>
    %cst_16 = arith.constant dense<0.000000e+00> : vector<128xf32>
    %19 = vector.multi_reduction <add>, %18, %cst_16 [1] : vector<128x32xf32> to vector<128xf32>
    %20 = vector.shape_cast %19 : vector<128xf32> to vector<128x1xf32>
    %cst_17 = arith.constant 3.200000e+01 : f32
    %21 = vector.broadcast %cst_17 : f32 to vector<128x1xf32>
    %22 = arith.divf %20, %21 : vector<128x1xf32>
    %23 = vector.broadcast %15 : vector<128x1xf32> to vector<128x32xf32>
    %24 = arith.subf %11, %23 : vector<128x32xf32>
    %cst_18 = arith.constant 9.99999974E-6 : f32
    %25 = vector.broadcast %cst_18 : f32 to vector<128x1xf32>
    %26 = arith.addf %22, %25 : vector<128x1xf32>
    %27 = math.rsqrt %26 : vector<128x1xf32>
    %28 = vector.broadcast %27 : vector<128x1xf32> to vector<128x32xf32>
    %29 = arith.mulf %24, %28 : vector<128x32xf32>
    %30 = vector.broadcast %0 : vector<1x32xf32> to vector<128x32xf32>
    %31 = arith.mulf %29, %30 : vector<128x32xf32>
    %32 = vector.broadcast %1 : vector<1x32xf32> to vector<128x32xf32>
    %33 = arith.addf %31, %32 : vector<128x32xf32>
    %34 = arith.truncf %33 : vector<128x32xf32> to vector<128x32xbf16>
    %cst_19 = arith.constant dense<0.000000e+00> : vector<128x64xf32>
    %35 = tpu.matmul %34, %9, %cst_19 {dimension_numbers = #tpu.dot_dimension_numbers<[1], [0], [0], [1], [0, 0, 1, 1], [], []>} : vector<128x32xbf16>, vector<32x64xbf16>, vector<128x64xf32> -> vector<128x64xf32>
    %36 = vector.broadcast %2 : vector<1x64xf32> to vector<128x64xf32>
    %37 = arith.addf %35, %36 : vector<128x64xf32>
    %cst_20 = arith.constant 5.000000e-01 : f32
    %38 = vector.broadcast %cst_20 : f32 to vector<128x64xf32>
    %39 = arith.mulf %38, %37 : vector<128x64xf32>
    %cst_21 = arith.constant 0.707106769 : f32
    %40 = vector.broadcast %cst_21 : f32 to vector<128x64xf32>
    %41 = arith.mulf %37, %40 : vector<128x64xf32>
    %42 = math.erf %41 : vector<128x64xf32>
    %cst_22 = arith.constant 1.000000e+00 : f32
    %43 = vector.broadcast %cst_22 : f32 to vector<128x64xf32>
    %44 = arith.addf %43, %42 : vector<128x64xf32>
    %45 = arith.mulf %39, %44 : vector<128x64xf32>
    %46 = arith.truncf %45 : vector<128x64xf32> to vector<128x64xbf16>
    %cst_23 = arith.constant dense<0.000000e+00> : vector<16x64xf32>
    %47 = tpu.matmul %10, %46, %cst_23 {dimension_numbers = #tpu.dot_dimension_numbers<[1], [0], [0], [1], [0, 0, 1, 1], [], []>} : vector<16x128xbf16>, vector<128x64xbf16>, vector<16x64xf32> -> vector<16x64xf32>
    %48 = arith.truncf %47 : vector<16x64xf32> to vector<16x64xbf16>
    %c0_24 = arith.constant 0 : index
    %c0_25 = arith.constant 0 : index
    %49 = vector.load %arg4[%c0_24, %c0_25] : memref<64x512xbf16, #tpu.memory_space<vmem>>, vector<64x512xbf16>
    %cst_26 = arith.constant dense<0.000000e+00> : vector<16x512xf32>
    %50 = tpu.matmul %48, %49, %cst_26 {dimension_numbers = #tpu.dot_dimension_numbers<[1], [0], [0], [1], [0, 0, 1, 1], [], []>} : vector<16x64xbf16>, vector<64x512xbf16>, vector<16x512xf32> -> vector<16x512xf32>
    %51 = vector.broadcast %6 : vector<1x512xf32> to vector<16x512xf32>
    %52 = arith.addf %50, %51 : vector<16x512xf32>
    %cst_27 = arith.constant 5.000000e-01 : f32
    %53 = vector.broadcast %cst_27 : f32 to vector<16x512xf32>
    %54 = arith.mulf %53, %52 : vector<16x512xf32>
    %cst_28 = arith.constant 0.707106769 : f32
    %55 = vector.broadcast %cst_28 : f32 to vector<16x512xf32>
    %56 = arith.mulf %52, %55 : vector<16x512xf32>
    %57 = math.erf %56 : vector<16x512xf32>
    %cst_29 = arith.constant 1.000000e+00 : f32
    %58 = vector.broadcast %cst_29 : f32 to vector<16x512xf32>
    %59 = arith.addf %58, %57 : vector<16x512xf32>
    %60 = arith.mulf %54, %59 : vector<16x512xf32>
    %cst_30 = arith.constant dense<0.000000e+00> : vector<16xf32>
    %61 = vector.multi_reduction <add>, %60, %cst_30 [1] : vector<16x512xf32> to vector<16xf32>
    %62 = vector.shape_cast %61 : vector<16xf32> to vector<16x1xf32>
    %cst_31 = arith.constant 5.120000e+02 : f32
    %63 = vector.broadcast %cst_31 : f32 to vector<16x1xf32>
    %64 = arith.divf %62, %63 : vector<16x1xf32>
    %65 = vector.broadcast %64 : vector<16x1xf32> to vector<16x512xf32>
    %66 = arith.subf %60, %65 : vector<16x512xf32>
    %67 = arith.mulf %66, %66 : vector<16x512xf32>
    %cst_32 = arith.constant dense<0.000000e+00> : vector<16xf32>
    %68 = vector.multi_reduction <add>, %67, %cst_32 [1] : vector<16x512xf32> to vector<16xf32>
    %69 = vector.shape_cast %68 : vector<16xf32> to vector<16x1xf32>
    %cst_33 = arith.constant 5.120000e+02 : f32
    %70 = vector.broadcast %cst_33 : f32 to vector<16x1xf32>
    %71 = arith.divf %69, %70 : vector<16x1xf32>
    %72 = vector.broadcast %64 : vector<16x1xf32> to vector<16x512xf32>
    %73 = arith.subf %60, %72 : vector<16x512xf32>
    %cst_34 = arith.constant 9.99999974E-6 : f32
    %74 = vector.broadcast %cst_34 : f32 to vector<16x1xf32>
    %75 = arith.addf %71, %74 : vector<16x1xf32>
    %76 = math.rsqrt %75 : vector<16x1xf32>
    %77 = vector.broadcast %76 : vector<16x1xf32> to vector<16x512xf32>
    %78 = arith.mulf %73, %77 : vector<16x512xf32>
    %79 = vector.broadcast %7 : vector<1x512xf32> to vector<16x512xf32>
    %80 = arith.mulf %78, %79 : vector<16x512xf32>
    %81 = vector.broadcast %8 : vector<1x512xf32> to vector<16x512xf32>
    %82 = arith.addf %80, %81 : vector<16x512xf32>
    %83 = arith.truncf %82 : vector<16x512xf32> to vector<16x512xbf16>
    %c0_35 = arith.constant 0 : index
    %c0_36 = arith.constant 0 : index
    %84 = vector.load %arg5[%c0_35, %c0_36] : memref<512x64xbf16, #tpu.memory_space<vmem>>, vector<512x64xbf16>
    %cst_37 = arith.constant dense<0.000000e+00> : vector<16x64xf32>
    %85 = tpu.matmul %83, %84, %cst_37 {dimension_numbers = #tpu.dot_dimension_numbers<[1], [0], [0], [1], [0, 0, 1, 1], [], []>} : vector<16x512xbf16>, vector<512x64xbf16>, vector<16x64xf32> -> vector<16x64xf32>
    %86 = vector.broadcast %3 : vector<1x64xf32> to vector<16x64xf32>
    %87 = arith.addf %85, %86 : vector<16x64xf32>
    %cst_38 = arith.constant dense<0.000000e+00> : vector<16xf32>
    %88 = vector.multi_reduction <add>, %87, %cst_38 [1] : vector<16x64xf32> to vector<16xf32>
    %89 = vector.shape_cast %88 : vector<16xf32> to vector<16x1xf32>
    %cst_39 = arith.constant 6.400000e+01 : f32
    %90 = vector.broadcast %cst_39 : f32 to vector<16x1xf32>
    %91 = arith.divf %89, %90 : vector<16x1xf32>
    %92 = vector.broadcast %91 : vector<16x1xf32> to vector<16x64xf32>
    %93 = arith.subf %87, %92 : vector<16x64xf32>
    %94 = arith.mulf %93, %93 : vector<16x64xf32>
    %cst_40 = arith.constant dense<0.000000e+00> : vector<16xf32>
    %95 = vector.multi_reduction <add>, %94, %cst_40 [1] : vector<16x64xf32> to vector<16xf32>
    %96 = vector.shape_cast %95 : vector<16xf32> to vector<16x1xf32>
    %cst_41 = arith.constant 6.400000e+01 : f32
    %97 = vector.broadcast %cst_41 : f32 to vector<16x1xf32>
    %98 = arith.divf %96, %97 : vector<16x1xf32>
    %99 = vector.broadcast %91 : vector<16x1xf32> to vector<16x64xf32>
    %100 = arith.subf %87, %99 : vector<16x64xf32>
    %cst_42 = arith.constant 9.99999974E-6 : f32
    %101 = vector.broadcast %cst_42 : f32 to vector<16x1xf32>
    %102 = arith.addf %98, %101 : vector<16x1xf32>
    %103 = math.rsqrt %102 : vector<16x1xf32>
    %104 = vector.broadcast %103 : vector<16x1xf32> to vector<16x64xf32>
    %105 = arith.mulf %100, %104 : vector<16x64xf32>
    %106 = vector.broadcast %4 : vector<1x64xf32> to vector<16x64xf32>
    %107 = arith.mulf %105, %106 : vector<16x64xf32>
    %108 = vector.broadcast %5 : vector<1x64xf32> to vector<16x64xf32>
    %109 = arith.addf %107, %108 : vector<16x64xf32>
    %c0_43 = arith.constant 0 : index
    %c0_44 = arith.constant 0 : index
    %110 = vector.load %arg6[%c0_43, %c0_44] : memref<16x64xf32, #tpu.memory_space<vmem>>, vector<16x64xf32>
    tpu.vector_store %arg6[%c0_43, %c0_44], %109 {strides = array<i32>} : memref<16x64xf32, #tpu.memory_space<vmem>>, vector<16x64xf32>,
    return
  }
  func.func @transform_0(%arg0: i32) -> (i32, i32) {
    %c0_i32 = arith.constant 0 : i32
    %c0_i32_0 = arith.constant 0 : i32
    %c0_i32_1 = arith.constant 0 : i32
    return %c0_i32, %c0_i32_0 : i32, i32
  }
  func.func @transform_1(%arg0: i32) -> (i32, i32) {
    %c0_i32 = arith.constant 0 : i32
    %c0_i32_0 = arith.constant 0 : i32
    %c0_i32_1 = arith.constant 0 : i32
    return %c0_i32, %c0_i32_0 : i32, i32
  }
  func.func @transform_2(%arg0: i32) -> (i32, i32) {
    %c0_i32 = arith.constant 0 : i32
    %c0_i32_0 = arith.constant 0 : i32
    %c0_i32_1 = arith.constant 0 : i32
    return %c0_i32, %c0_i32_0 : i32, i32
  }
  func.func @transform_3(%arg0: i32) -> (i32, i32) {
    %c0_i32 = arith.constant 0 : i32
    %c0_i32_0 = arith.constant 0 : i32
    %c0_i32_1 = arith.constant 0 : i32
    return %c0_i32, %c0_i32_0 : i32, i32
  }
  func.func @transform_4(%arg0: i32) -> (i32, i32) {
    %c0_i32 = arith.constant 0 : i32
    %c0_i32_0 = arith.constant 0 : i32
    %c0_i32_1 = arith.constant 0 : i32
    return %c0_i32, %c0_i32_0 : i32, i32
  }
  func.func @transform_5(%arg0: i32) -> (i32, i32) {
    %c0_i32 = arith.constant 0 : i32
    %c0_i32_0 = arith.constant 0 : i32
    %c0_i32_1 = arith.constant 0 : i32
    return %c0_i32, %c0_i32_0 : i32, i32
  }
}

</mosaic_0001>

<llo_original>
// kernel: tpu_custom_call.1
$region0: #{tpu_custom_call.1}
  #allocation0 [shape = 'u32[]', space=smem, size = 0x4, offset = 0x4, fixed_abs, tag = 'smem constant byte address 0x4 - core index']
  #allocation1 [shape = 'u32[144,128]{1,0:T(1,128)}', space=vmem, size = 0x12000, scoped, tag = 'internal scratch']
  %s0 = inlined_call_operand.vmem [shape: f32[128,32], index: 0, kind: input, shape index: {}]
  %s1 = inlined_call_operand.vmem [shape: bf16[48,128], index: 1, kind: input, shape index: {}]
  %s2 = inlined_call_operand.vmem [shape: f32[8,512], index: 2, kind: input, shape index: {}]
  %s3 = inlined_call_operand.vmem [shape: bf16[64,512], index: 3, kind: input, shape index: {}]
  %s4 = inlined_call_operand.vmem [shape: bf16[512,64], index: 4, kind: input, shape index: {}]
  %s5 = inlined_call_operand.hbm [shape: f32[16,64], index: 5, kind: output, shape index: {}]
  %s6 = sld [smem:[#allocation0]]
  $region30: #{tpu_custom_call.1} parent=0
    _
  %s8 = ssub.s32 1, %s6
  %s9 = scalar_select 0, %s8, %s6
  $region1: #{tpu_custom_call.1} parent=0
    #allocation2 [shape = 'u8[8192]{0}', space=vmem, size = 0x2000, scoped, tag = 'output window, operand 0, single buffered']
    #allocation3 [shape = 's32[1]{0}', space=sflag, size = 0x4, scoped, tag = 'scoped memory for tpu_custom_call.1']
    %10 = vsyncpa [#allocation3], 0
    // Predicated region
    $region2: #{tpu_custom_call.1} parent=1 // pred_check
      _
    $region3: #{tpu_custom_call.1} parent=1 // pred_check_branch
      %12 = sbr.rel (0) target = $region5
    $region4: #{tpu_custom_call.1} parent=1 // pred_region
      _
    $region5: #{tpu_custom_call.1} parent=1 // pred_fallthru
      _
    // Predicated region
    $region6: #{tpu_custom_call.1} parent=1 // pred_check
      _
    $region7: #{tpu_custom_call.1} parent=1 // pred_check_branch
      %14 = sbr.rel (0) target = $region9
    $region8: #{tpu_custom_call.1} parent=1 // pred_region
      _
    $region9: #{tpu_custom_call.1} parent=1 // pred_fallthru
      _
    // Predicated region
    $region10: #{tpu_custom_call.1} parent=1 // pred_check
      _
    $region11: #{tpu_custom_call.1} parent=1 // pred_check_branch
      %16 = sbr.rel (0) target = $region13
    $region12: #{tpu_custom_call.1} parent=1 // pred_region
      _
    $region13: #{tpu_custom_call.1} parent=1 // pred_fallthru
      _
    // Predicated region
    $region14: #{tpu_custom_call.1} parent=1 // pred_check
      _
    $region15: #{tpu_custom_call.1} parent=1 // pred_check_branch
      %18 = sbr.rel (0) target = $region17
    $region16: #{tpu_custom_call.1} parent=1 // pred_region
      _
    $region17: #{tpu_custom_call.1} parent=1 // pred_fallthru
      _
    // Predicated region
    $region18: #{tpu_custom_call.1} parent=1 // pred_check
      _
    $region19: #{tpu_custom_call.1} parent=1 // pred_check_branch
      %20 = sbr.rel (0) target = $region21
    $region20: #{tpu_custom_call.1} parent=1 // pred_region
      _
    $region21: #{tpu_custom_call.1} parent=1 // pred_fallthru
      _
    %v22 = vld [vmem:[%s2] ss:$0 sm:$0xff]
    %v23 = vld [vmem:[%s2 + $0x8] ss:$0 sm:$0xff]
    %v24 = vld [vmem:[%s2 + $0x10] ss:$0 sm:$0xff]
    %v25 = vld [vmem:[%s2 + $0x18] ss:$0 sm:$0xff]
    %v26 = vld [vmem:[%s2 + $0x1] ss:$0 sm:$0xff]
    %v27 = vld [vmem:[%s2 + $0x9] ss:$0 sm:$0xff]
    %s28 = scalar_lea.vmem %s2, 2
    %v29 = vld [vmem:[%s28] ss:$8 sm:$0xf]
    %s30 = scalar_lea.vmem %s2, 3
    %v31 = vld [vmem:[%s30] ss:$8 sm:$0xf]
    %s32 = scalar_lea.vmem %s2, 4
    %v33 = vld [vmem:[%s32] ss:$8 sm:$0xf]
    %v34 = vld [vmem:[%s1] sm:$0xf]
    %v35 = vld [vmem:[%s1 + $0x4] sm:$0xf]
    %v36 = vld [vmem:[%s1 + $0x8] sm:$0xf]
    %v37 = vld [vmem:[%s1 + $0xc] sm:$0xf]
    %v38 = vld [vmem:[%s1 + $0x10] sm:$0xf]
    %v39 = vld [vmem:[%s1 + $0x14] sm:$0xf]
    %v40 = vld [vmem:[%s0] sm:$0xff]
    %v41 = vld [vmem:[%s0 + $0x8] sm:$0xff]
    %v42 = vld [vmem:[%s0 + $0x10] sm:$0xff]
    %v43 = vld [vmem:[%s0 + $0x18] sm:$0xff]
    %v44 = vld [vmem:[%s0 + $0x20] sm:$0xff]
    %v45 = vld [vmem:[%s0 + $0x28] sm:$0xff]
    %v46 = vld [vmem:[%s0 + $0x30] sm:$0xff]
    %v47 = vld [vmem:[%s0 + $0x38] sm:$0xff]
    %v48 = vld [vmem:[%s0 + $0x40] sm:$0xff]
    %v49 = vld [vmem:[%s0 + $0x48] sm:$0xff]
    %v50 = vld [vmem:[%s0 + $0x50] sm:$0xff]
    %v51 = vld [vmem:[%s0 + $0x58] sm:$0xff]
    %v52 = vld [vmem:[%s0 + $0x60] sm:$0xff]
    %v53 = vld [vmem:[%s0 + $0x68] sm:$0xff]
    %v54 = vld [vmem:[%s0 + $0x70] sm:$0xff]
    %v55 = vld [vmem:[%s0 + $0x78] sm:$0xff]
    %vm56 = vcmask 261120
    %v57 = vsel %vm56, %v40, 0.0
    %58 = vadd.xlane.f32.xlu0 %v57
    %v59 = vpop.xlane.xlu0 %58
    %v60 = vsel %vm56, %v41, 0.0
    %61 = vadd.xlane.f32.xlu0 %v60
    %v62 = vpop.xlane.xlu0 %61
    %v63 = vsel %vm56, %v42, 0.0
    %64 = vadd.xlane.f32.xlu0 %v63
    %v65 = vpop.xlane.xlu0 %64
    %v66 = vsel %vm56, %v43, 0.0
    %67 = vadd.xlane.f32.xlu0 %v66
    %v68 = vpop.xlane.xlu0 %67
    %v69 = vsel %vm56, %v44, 0.0
    %70 = vadd.xlane.f32.xlu0 %v69
    %v71 = vpop.xlane.xlu0 %70
    %v72 = vsel %vm56, %v45, 0.0
    %73 = vadd.xlane.f32.xlu0 %v72
    %v74 = vpop.xlane.xlu0 %73
    %v75 = vsel %vm56, %v46, 0.0
    %76 = vadd.xlane.f32.xlu0 %v75
    %v77 = vpop.xlane.xlu0 %76
    %v78 = vsel %vm56, %v47, 0.0
    %79 = vadd.xlane.f32.xlu0 %v78
    %v80 = vpop.xlane.xlu0 %79
    %v81 = vsel %vm56, %v48, 0.0
    %82 = vadd.xlane.f32.xlu0 %v81
    %v83 = vpop.xlane.xlu0 %82
    %v84 = vsel %vm56, %v49, 0.0
    %85 = vadd.xlane.f32.xlu0 %v84
    %v86 = vpop.xlane.xlu0 %85
    %v87 = vsel %vm56, %v50, 0.0
    %88 = vadd.xlane.f32.xlu0 %v87
    %v89 = vpop.xlane.xlu0 %88
    %v90 = vsel %vm56, %v51, 0.0
    %91 = vadd.xlane.f32.xlu0 %v90
    %v92 = vpop.xlane.xlu0 %91
    %v93 = vsel %vm56, %v52, 0.0
    %94 = vadd.xlane.f32.xlu0 %v93
    %v95 = vpop.xlane.xlu0 %94
    %v96 = vsel %vm56, %v53, 0.0
    %97 = vadd.xlane.f32.xlu0 %v96
    %v98 = vpop.xlane.xlu0 %97
    %v99 = vsel %vm56, %v54, 0.0
    %100 = vadd.xlane.f32.xlu0 %v99
    %v101 = vpop.xlane.xlu0 %100
    %v102 = vsel %vm56, %v55, 0.0
    %103 = vadd.xlane.f32.xlu0 %v102
    %v104 = vpop.xlane.xlu0 %103
    %v105 = vrcp.pop 32.0
    %v106 = vmul.f32 %v59, %v105
    %v107 = vmul.f32 %v62, %v105
    %v108 = vmul.f32 %v65, %v105
    %v109 = vmul.f32 %v68, %v105
    %v110 = vmul.f32 %v71, %v105
    %v111 = vmul.f32 %v74, %v105
    %v112 = vmul.f32 %v77, %v105
    %v113 = vmul.f32 %v80, %v105
    %v114 = vmul.f32 %v83, %v105
    %v115 = vmul.f32 %v86, %v105
    %v116 = vmul.f32 %v89, %v105
    %v117 = vmul.f32 %v92, %v105
    %v118 = vmul.f32 %v95, %v105
    %v119 = vmul.f32 %v98, %v105
    %v120 = vmul.f32 %v101, %v105
    %v121 = vmul.f32 %v104, %v105
    %v122 = vsub.f32 %v40, %v106
    %v123 = vsub.f32 %v41, %v107
    %v124 = vsub.f32 %v42, %v108
    %v125 = vsub.f32 %v43, %v109
    %v126 = vsub.f32 %v44, %v110
    %v127 = vsub.f32 %v45, %v111
    %v128 = vsub.f32 %v46, %v112
    %v129 = vsub.f32 %v47, %v113
    %v130 = vsub.f32 %v48, %v114
    %v131 = vsub.f32 %v49, %v115
    %v132 = vsub.f32 %v50, %v116
    %v133 = vsub.f32 %v51, %v117
    %v134 = vsub.f32 %v52, %v118
    %v135 = vsub.f32 %v53, %v119
    %v136 = vsub.f32 %v54, %v120
    %v137 = vsub.f32 %v55, %v121
    %v138 = vmul.f32 %v122, %v122
    %v139 = vmul.f32 %v123, %v123
    %v140 = vmul.f32 %v124, %v124
    %v141 = vmul.f32 %v125, %v125
    %v142 = vmul.f32 %v126, %v126
    %v143 = vmul.f32 %v127, %v127
    %v144 = vmul.f32 %v128, %v128
    %v145 = vmul.f32 %v129, %v129
    %v146 = vmul.f32 %v130, %v130
    %v147 = vmul.f32 %v131, %v131
    %v148 = vmul.f32 %v132, %v132
    %v149 = vmul.f32 %v133, %v133
    %v150 = vmul.f32 %v134, %v134
    %v151 = vmul.f32 %v135, %v135
    %v152 = vmul.f32 %v136, %v136
    %v153 = vmul.f32 %v137, %v137
    %v154 = vsel %vm56, %v138, 0.0
    %155 = vadd.xlane.f32.xlu0 %v154
    %v156 = vpop.xlane.xlu0 %155
    %v157 = vsel %vm56, %v139, 0.0
    %158 = vadd.xlane.f32.xlu0 %v157
    %v159 = vpop.xlane.xlu0 %158
    %v160 = vsel %vm56, %v140, 0.0
    %161 = vadd.xlane.f32.xlu0 %v160
    %v162 = vpop.xlane.xlu0 %161
    %v163 = vsel %vm56, %v141, 0.0
    %164 = vadd.xlane.f32.xlu0 %v163
    %v165 = vpop.xlane.xlu0 %164
    %v166 = vsel %vm56, %v142, 0.0
    %167 = vadd.xlane.f32.xlu0 %v166
    %v168 = vpop.xlane.xlu0 %167
    %v169 = vsel %vm56, %v143, 0.0
    %170 = vadd.xlane.f32.xlu0 %v169
    %v171 = vpop.xlane.xlu0 %170
    %v172 = vsel %vm56, %v144, 0.0
    %173 = vadd.xlane.f32.xlu0 %v172
    %v174 = vpop.xlane.xlu0 %173
    %v175 = vsel %vm56, %v145, 0.0
    %176 = vadd.xlane.f32.xlu0 %v175
    %v177 = vpop.xlane.xlu0 %176
    %v178 = vsel %vm56, %v146, 0.0
    %179 = vadd.xlane.f32.xlu0 %v178
    %v180 = vpop.xlane.xlu0 %179
    %v181 = vsel %vm56, %v147, 0.0
    %182 = vadd.xlane.f32.xlu0 %v181
    %v183 = vpop.xlane.xlu0 %182
    %v184 = vsel %vm56, %v148, 0.0
    %185 = vadd.xlane.f32.xlu0 %v184
    %v186 = vpop.xlane.xlu0 %185
    %v187 = vsel %vm56, %v149, 0.0
    %188 = vadd.xlane.f32.xlu0 %v187
    %v189 = vpop.xlane.xlu0 %188
    %v190 = vsel %vm56, %v150, 0.0
    %191 = vadd.xlane.f32.xlu0 %v190
    %v192 = vpop.xlane.xlu0 %191
    %v193 = vsel %vm56, %v151, 0.0
    %194 = vadd.xlane.f32.xlu0 %v193
    %v195 = vpop.xlane.xlu0 %194
    %v196 = vsel %vm56, %v152, 0.0
    %197 = vadd.xlane.f32.xlu0 %v196
    %v198 = vpop.xlane.xlu0 %197
    %v199 = vsel %vm56, %v153, 0.0
    %200 = vadd.xlane.f32.xlu0 %v199
    %v201 = vpop.xlane.xlu0 %200
    %v202 = vmul.f32 %v156, %v105
    %v203 = vmul.f32 %v159, %v105
    %v204 = vmul.f32 %v162, %v105
    %v205 = vmul.f32 %v165, %v105
    %v206 = vmul.f32 %v168, %v105
    %v207 = vmul.f32 %v171, %v105
    %v208 = vmul.f32 %v174, %v105
    %v209 = vmul.f32 %v177, %v105
    %v210 = vmul.f32 %v180, %v105
    %v211 = vmul.f32 %v183, %v105
    %v212 = vmul.f32 %v186, %v105
    %v213 = vmul.f32 %v189, %v105
    %v214 = vmul.f32 %v192, %v105
    %v215 = vmul.f32 %v195, %v105
    %v216 = vmul.f32 %v198, %v105
    %v217 = vmul.f32 %v201, %v105
    %v218 = vadd.f32 %v202, 1e-05
    %v219 = vadd.f32 %v203, 1e-05
    %v220 = vadd.f32 %v204, 1e-05
    %v221 = vadd.f32 %v205, 1e-05
    %v222 = vadd.f32 %v206, 1e-05
    %v223 = vadd.f32 %v207, 1e-05
    %v224 = vadd.f32 %v208, 1e-05
    %v225 = vadd.f32 %v209, 1e-05
    %v226 = vadd.f32 %v210, 1e-05
    %v227 = vadd.f32 %v211, 1e-05
    %v228 = vadd.f32 %v212, 1e-05
    %v229 = vadd.f32 %v213, 1e-05
    %v230 = vadd.f32 %v214, 1e-05
    %v231 = vadd.f32 %v215, 1e-05
    %v232 = vadd.f32 %v216, 1e-05
    %v233 = vadd.f32 %v217, 1e-05
    %v234 = vrsqrt.pop %v218
    %v235 = vrsqrt.pop %v219
    %v236 = vrsqrt.pop %v220
    %v237 = vrsqrt.pop %v221
    %v238 = vrsqrt.pop %v222
    %v239 = vrsqrt.pop %v223
    %v240 = vrsqrt.pop %v224
    %v241 = vrsqrt.pop %v225
    %v242 = vrsqrt.pop %v226
    %v243 = vrsqrt.pop %v227
    %v244 = vrsqrt.pop %v228
    %v245 = vrsqrt.pop %v229
    %v246 = vrsqrt.pop %v230
    %v247 = vrsqrt.pop %v231
    %v248 = vrsqrt.pop %v232
    %v249 = vrsqrt.pop %v233
    %v250 = vmul.f32 %v122, %v234
    %v251 = vmul.f32 %v123, %v235
    %v252 = vmul.f32 %v124, %v236
    %v253 = vmul.f32 %v125, %v237
    %v254 = vmul.f32 %v126, %v238
    %v255 = vmul.f32 %v127, %v239
    %v256 = vmul.f32 %v128, %v240
    %v257 = vmul.f32 %v129, %v241
    %v258 = vmul.f32 %v130, %v242
    %v259 = vmul.f32 %v131, %v243
    %v260 = vmul.f32 %v132, %v244
    %v261 = vmul.f32 %v133, %v245
    %v262 = vmul.f32 %v134, %v246
    %v263 = vmul.f32 %v135, %v247
    %v264 = vmul.f32 %v136, %v248
    %v265 = vmul.f32 %v137, %v249
    %v266 = vmul.f32 %v250, %v22
    %v267 = vmul.f32 %v251, %v22
    %v268 = vmul.f32 %v252, %v22
    %v269 = vmul.f32 %v253, %v22
    %v270 = vmul.f32 %v254, %v22
    %v271 = vmul.f32 %v255, %v22
    %v272 = vmul.f32 %v256, %v22
    %v273 = vmul.f32 %v257, %v22
    %v274 = vmul.f32 %v258, %v22
    %v275 = vmul.f32 %v259, %v22
    %v276 = vmul.f32 %v260, %v22
    %v277 = vmul.f32 %v261, %v22
    %v278 = vmul.f32 %v262, %v22
    %v279 = vmul.f32 %v263, %v22
    %v280 = vmul.f32 %v264, %v22
    %v281 = vmul.f32 %v265, %v22
    %v282 = vadd.f32 %v266, %v23
    %v283 = vadd.f32 %v267, %v23
    %v284 = vadd.f32 %v268, %v23
    %v285 = vadd.f32 %v269, %v23
    %v286 = vadd.f32 %v270, %v23
    %v287 = vadd.f32 %v271, %v23
    %v288 = vadd.f32 %v272, %v23
    %v289 = vadd.f32 %v273, %v23
    %v290 = vadd.f32 %v274, %v23
    %v291 = vadd.f32 %v275, %v23
    %v292 = vadd.f32 %v276, %v23
    %v293 = vadd.f32 %v277, %v23
    %v294 = vadd.f32 %v278, %v23
    %v295 = vadd.f32 %v279, %v23
    %v296 = vadd.f32 %v280, %v23
    %v297 = vadd.f32 %v281, %v23
    %v298 = vpack.c.bf16 %v283, %v282
    %v299 = vpack.c.bf16 %v285, %v284
    %v300 = vpack.c.bf16 %v287, %v286
    %v301 = vpack.c.bf16 %v289, %v288
    %v302 = vpack.c.bf16 %v291, %v290
    %v303 = vpack.c.bf16 %v293, %v292
    %v304 = vpack.c.bf16 %v295, %v294
    %v305 = vpack.c.bf16 %v297, %v296
    %v310 = vunpack.c.l.b16 %v34
    %v311 = vunpack.c.l.b16 %v35
    %v312 = vunpack.c.l.b16 %v36
    %v313 = vunpack.c.l.b16 %v37
    %v314 = vpack.c.b16 %v311, %v310
    %v315 = vpack.c.b16 %v313, %v312
    %v319 = vsel %vm56, %v298, 0
    %v322 = vsel %vm56, %v299, 0
    %v325 = vsel %vm56, %v300, 0
    %v328 = vsel %vm56, %v301, 0
    %v331 = vsel %vm56, %v302, 0
    %v334 = vsel %vm56, %v303, 0
    %v337 = vsel %vm56, %v304, 0
    %v340 = vsel %vm56, %v305, 0
    %342 = vmatprep.subr.bf16.mxu0 0
    %343 = vmatpush1.bf16.msra.mxu0 0
    %344 = vmatprep.subr.bf16.mxu0 0
    %345 = vmatpush1.bf16.msra.mxu0 0
    %346 = vmatprep.subr.bf16.mxu0 0
    %347 = vmatpush1.bf16.msra.mxu0 0
    %348 = vmatprep.subr.bf16.mxu0 0
    %349 = vmatpush1.bf16.msra.mxu0 0
    %350 = vmatprep.subr.bf16.mxu0 0
    %351 = vmatpush1.bf16.msra.mxu0 0
    %352 = vmatprep.subr.bf16.mxu0 0
    %353 = vmatpush1.bf16.msra.mxu0 0
    %354 = vmatprep.subr.bf16.mxu0 0
    %355 = vmatpush1.bf16.msra.mxu0 %v315
    %356 = vmatprep.subr.bf16.mxu0 0
    %357 = vmatpush1.bf16.msra.mxu0 %v314
    %358 = vmatprep.subr.bf16.mxu0 0
    %359 = vmatpush2.bf16.msra.mxu0 0
    %360 = vmatprep.subr.bf16.mxu0 0
    %361 = vmatpush2.bf16.msra.mxu0 0
    %362 = vmatprep.subr.bf16.mxu0 0
    %363 = vmatpush2.bf16.msra.mxu0 0
    %364 = vmatprep.subr.bf16.mxu0 0
    %365 = vmatpush2.bf16.msra.mxu0 0
    %366 = vmatprep.subr.bf16.mxu0 0
    %367 = vmatpush2.bf16.msra.mxu0 0
    %368 = vmatprep.subr.bf16.mxu0 0
    %369 = vmatpush2.bf16.msra.mxu0 0
    %370 = vmatprep.subr.bf16.mxu0 0
    %371 = vmatpush2.bf16.msra.mxu0 0
    %372 = vmatprep.subr.bf16.mxu0 0
    %373 = vmatpush2.bf16.msra.mxu0 0
    %374 = vmatprep.mubr.bf16.mxu0 0
    %375 = vmatmul.mubr.bf16.gmra.mxu0 %v319
    %v376 = vpop.f32.mrf.mxu0
    %v377 = vadd.f32 %v24, %v376
    %v378 = vpop.f32.mrf.mxu0
    %v379 = vpop.f32.mrf.mxu0
    %v380 = vadd.f32 %v24, %v379
    %v381 = vpop.f32.mrf.mxu0
    %382 = vmatprep.mubr.bf16.mxu0 0
    %383 = vmatmul.mubr.bf16.gmra.mxu0 %v322
    %v384 = vpop.f32.mrf.mxu0
    %v385 = vadd.f32 %v24, %v384
    %v386 = vpop.f32.mrf.mxu0
    %v387 = vpop.f32.mrf.mxu0
    %v388 = vadd.f32 %v24, %v387
    %v389 = vpop.f32.mrf.mxu0
    %390 = vmatprep.mubr.bf16.mxu0 0
    %391 = vmatmul.mubr.bf16.gmra.mxu0 %v325
    %v392 = vpop.f32.mrf.mxu0
    %v393 = vadd.f32 %v24, %v392
    %v394 = vpop.f32.mrf.mxu0
    %v395 = vpop.f32.mrf.mxu0
    %v396 = vadd.f32 %v24, %v395
    %v397 = vpop.f32.mrf.mxu0
    %398 = vmatprep.mubr.bf16.mxu0 0
    %399 = vmatmul.mubr.bf16.gmra.mxu0 %v328
    %v400 = vpop.f32.mrf.mxu0
    %v401 = vadd.f32 %v24, %v400
    %v402 = vpop.f32.mrf.mxu0
    %v403 = vpop.f32.mrf.mxu0
    %v404 = vadd.f32 %v24, %v403
    %v405 = vpop.f32.mrf.mxu0
    %406 = vmatprep.mubr.bf16.mxu0 0
    %407 = vmatmul.mubr.bf16.gmra.mxu0 %v331
    %v408 = vpop.f32.mrf.mxu0
    %v409 = vadd.f32 %v24, %v408
    %v410 = vpop.f32.mrf.mxu0
    %v411 = vpop.f32.mrf.mxu0
    %v412 = vadd.f32 %v24, %v411
    %v413 = vpop.f32.mrf.mxu0
    %414 = vmatprep.mubr.bf16.mxu0 0
    %415 = vmatmul.mubr.bf16.gmra.mxu0 %v334
    %v416 = vpop.f32.mrf.mxu0
    %v417 = vadd.f32 %v24, %v416
    %v418 = vpop.f32.mrf.mxu0
    %v419 = vpop.f32.mrf.mxu0
    %v420 = vadd.f32 %v24, %v419
    %v421 = vpop.f32.mrf.mxu0
    %422 = vmatprep.mubr.bf16.mxu0 0
    %423 = vmatmul.mubr.bf16.gmra.mxu0 %v337
    %v424 = vpop.f32.mrf.mxu0
    %v425 = vadd.f32 %v24, %v424
    %v426 = vpop.f32.mrf.mxu0
    %v427 = vpop.f32.mrf.mxu0
    %v428 = vadd.f32 %v24, %v427
    %v429 = vpop.f32.mrf.mxu0
    %430 = vmatprep.mubr.bf16.mxu0 0
    %431 = vmatmul.mubr.bf16.gmra.mxu0 %v340
    %v432 = vpop.f32.mrf.mxu0
    %v433 = vadd.f32 %v24, %v432
    %v434 = vpop.f32.mrf.mxu0
    %v435 = vpop.f32.mrf.mxu0
    %v436 = vadd.f32 %v24, %v435
    %v437 = vpop.f32.mrf.mxu0
    %438 = vdwg.mxu0
    %v439 = vmul.f32 %v377, 0.5
    %v440 = vmul.f32 %v380, 0.5
    %v441 = vmul.f32 %v385, 0.5
    %v442 = vmul.f32 %v388, 0.5
    %v443 = vmul.f32 %v393, 0.5
    %v444 = vmul.f32 %v396, 0.5
    %v445 = vmul.f32 %v401, 0.5
    %v446 = vmul.f32 %v404, 0.5
    %v447 = vmul.f32 %v409, 0.5
    %v448 = vmul.f32 %v412, 0.5
    %v449 = vmul.f32 %v417, 0.5
    %v450 = vmul.f32 %v420, 0.5
    %v451 = vmul.f32 %v425, 0.5
    %v452 = vmul.f32 %v428, 0.5
    %v453 = vmul.f32 %v433, 0.5
    %v454 = vmul.f32 %v436, 0.5
    %v455 = vmul.f32 %v377, 0.70710677
    %v456 = vmul.f32 %v380, 0.70710677
    %v457 = vmul.f32 %v385, 0.70710677
    %v458 = vmul.f32 %v388, 0.70710677
    %v459 = vmul.f32 %v393, 0.70710677
    %v460 = vmul.f32 %v396, 0.70710677
    %v461 = vmul.f32 %v401, 0.70710677
    %v462 = vmul.f32 %v404, 0.70710677
    %v463 = vmul.f32 %v409, 0.70710677
    %v464 = vmul.f32 %v412, 0.70710677
    %v465 = vmul.f32 %v417, 0.70710677
    %v466 = vmul.f32 %v420, 0.70710677
    %v467 = vmul.f32 %v425, 0.70710677
    %v468 = vmul.f32 %v428, 0.70710677
    %v469 = vmul.f32 %v433, 0.70710677
    %v470 = vmul.f32 %v436, 0.70710677
    %v471 = verf.f32.pop %v455
    %v472 = verf.f32.pop %v456
    %v473 = verf.f32.pop %v457
    %v474 = verf.f32.pop %v458
    %v475 = verf.f32.pop %v459
    %v476 = verf.f32.pop %v460
    %v477 = verf.f32.pop %v461
    %v478 = verf.f32.pop %v462
    %v479 = verf.f32.pop %v463
    %v480 = verf.f32.pop %v464
    %v481 = verf.f32.pop %v465
    %v482 = verf.f32.pop %v466
    %v483 = verf.f32.pop %v467
    %v484 = verf.f32.pop %v468
    %v485 = verf.f32.pop %v469
    %v486 = verf.f32.pop %v470
    %v487 = vadd.f32 %v471, 1.0
    %v488 = vadd.f32 %v472, 1.0
    %v489 = vadd.f32 %v473, 1.0
    %v490 = vadd.f32 %v474, 1.0
    %v491 = vadd.f32 %v475, 1.0
    %v492 = vadd.f32 %v476, 1.0
    %v493 = vadd.f32 %v477, 1.0
    %v494 = vadd.f32 %v478, 1.0
    %v495 = vadd.f32 %v479, 1.0
    %v496 = vadd.f32 %v480, 1.0
    %v497 = vadd.f32 %v481, 1.0
    %v498 = vadd.f32 %v482, 1.0
    %v499 = vadd.f32 %v483, 1.0
    %v500 = vadd.f32 %v484, 1.0
    %v501 = vadd.f32 %v485, 1.0
    %v502 = vadd.f32 %v486, 1.0
    %v503 = vmul.f32 %v439, %v487
    %v504 = vmul.f32 %v440, %v488
    %v505 = vmul.f32 %v441, %v489
    %v506 = vmul.f32 %v442, %v490
    %v507 = vmul.f32 %v443, %v491
    %v508 = vmul.f32 %v444, %v492
    %v509 = vmul.f32 %v445, %v493
    %v510 = vmul.f32 %v446, %v494
    %v511 = vmul.f32 %v447, %v495
    %v512 = vmul.f32 %v448, %v496
    %v513 = vmul.f32 %v449, %v497
    %v514 = vmul.f32 %v450, %v498
    %v515 = vmul.f32 %v451, %v499
    %v516 = vmul.f32 %v452, %v500
    %v517 = vmul.f32 %v453, %v501
    %v518 = vmul.f32 %v454, %v502
    %v519 = vpack.c.bf16 %v504, %v503
    %v520 = vpack.c.bf16 %v506, %v505
    %v521 = vpack.c.bf16 %v508, %v507
    %v522 = vpack.c.bf16 %v510, %v509
    %v523 = vpack.c.bf16 %v512, %v511
    %v524 = vpack.c.bf16 %v514, %v513
    %v525 = vpack.c.bf16 %v516, %v515
    %v526 = vpack.c.bf16 %v518, %v517
    %v529 = vunpack.c.l.b16 %v38
    %v530 = vunpack.c.l.b16 %v39
    %v531 = vpack.c.b16 %v530, %v529
    %533 = vmatprep.subr.bf16.mxu0 0
    %534 = vmatpush1.bf16.msra.mxu0 %v526
    %535 = vmatprep.subr.bf16.mxu0 0
    %536 = vmatpush1.bf16.msra.mxu0 %v525
    %537 = vmatprep.subr.bf16.mxu0 0
    %538 = vmatpush1.bf16.msra.mxu0 %v524
    %539 = vmatprep.subr.bf16.mxu0 0
    %540 = vmatpush1.bf16.msra.mxu0 %v523
    %541 = vmatprep.subr.bf16.mxu0 0
    %542 = vmatpush1.bf16.msra.mxu0 %v522
    %543 = vmatprep.subr.bf16.mxu0 0
    %544 = vmatpush1.bf16.msra.mxu0 %v521
    %545 = vmatprep.subr.bf16.mxu0 0
    %546 = vmatpush1.bf16.msra.mxu0 %v520
    %547 = vmatprep.subr.bf16.mxu0 0
    %548 = vmatpush1.bf16.msra.mxu0 %v519
    %549 = vmatprep.subr.bf16.mxu0 0
    %550 = vmatpush2.bf16.msra.mxu0 0
    %551 = vmatprep.subr.bf16.mxu0 0
    %552 = vmatpush2.bf16.msra.mxu0 0
    %553 = vmatprep.subr.bf16.mxu0 0
    %554 = vmatpush2.bf16.msra.mxu0 0
    %555 = vmatprep.subr.bf16.mxu0 0
    %556 = vmatpush2.bf16.msra.mxu0 0
    %557 = vmatprep.subr.bf16.mxu0 0
    %558 = vmatpush2.bf16.msra.mxu0 0
    %559 = vmatprep.subr.bf16.mxu0 0
    %560 = vmatpush2.bf16.msra.mxu0 0
    %561 = vmatprep.subr.bf16.mxu0 0
    %562 = vmatpush2.bf16.msra.mxu0 0
    %563 = vmatprep.subr.bf16.mxu0 0
    %564 = vmatpush2.bf16.msra.mxu0 0
    %565 = vmatprep.mubr.bf16.mxu0 0
    %566 = vmatmul.mubr.bf16.gmra.mxu0 %v531
    %v567 = vpop.f32.mrf.mxu0
    %v568 = vadd.f32 0.0, %v567
    %v569 = vpop.f32.mrf.mxu0
    %v570 = vpop.f32.mrf.mxu0
    %v571 = vadd.f32 0.0, %v570
    %v572 = vpop.f32.mrf.mxu0
    %573 = vdwg.mxu0
    %v574 = vpack.c.bf16 %v571, %v568
    %v575 = vld [vmem:[%s3] sm:$0xff]
    %v576 = vld [vmem:[%s3 + $0x8] sm:$0xff]
    %v577 = vld [vmem:[%s3 + $0x10] sm:$0xff]
    %v578 = vld [vmem:[%s3 + $0x18] sm:$0xff]
    %v579 = vld [vmem:[%s3 + $0x20] sm:$0xff]
    %v580 = vld [vmem:[%s3 + $0x28] sm:$0xff]
    %v581 = vld [vmem:[%s3 + $0x30] sm:$0xff]
    %v582 = vld [vmem:[%s3 + $0x38] sm:$0xff]
    %v583 = vld [vmem:[%s3 + $0x40] sm:$0xff]
    %v584 = vld [vmem:[%s3 + $0x48] sm:$0xff]
    %v585 = vld [vmem:[%s3 + $0x50] sm:$0xff]
    %v586 = vld [vmem:[%s3 + $0x58] sm:$0xff]
    %v587 = vld [vmem:[%s3 + $0x60] sm:$0xff]
    %v588 = vld [vmem:[%s3 + $0x68] sm:$0xff]
    %v589 = vld [vmem:[%s3 + $0x70] sm:$0xff]
    %v590 = vld [vmem:[%s3 + $0x78] sm:$0xff]
    %v592 = vlaneseq
    %v593 = vshrl.u32 %v592, 7
    %v594 = vsub.s32 0, %v593
    %v595 = vrot.slane %v29, %v594
    %v596 = vlaneseq
    %v597 = vshrl.u32 %v596, 7
    %v598 = vsub.s32 1, %v597
    %v599 = vrot.slane %v29, %v598
    %v600 = vlaneseq
    %v601 = vshrl.u32 %v600, 7
    %v602 = vsub.s32 2, %v601
    %v603 = vrot.slane %v29, %v602
    %v604 = vlaneseq
    %v605 = vshrl.u32 %v604, 7
    %v606 = vsub.s32 3, %v605
    %v607 = vrot.slane %v29, %v606
    %v628 = vunpack.c.l.b16 %v575
    %v629 = vunpack.c.h.b16 %v575
    %v630 = vunpack.c.l.b16 %v576
    %v631 = vunpack.c.h.b16 %v576
    %v632 = vunpack.c.l.b16 %v577
    %v633 = vunpack.c.h.b16 %v577
    %v634 = vunpack.c.l.b16 %v578
    %v635 = vunpack.c.h.b16 %v578
    %v636 = vunpack.c.l.b16 %v579
    %v637 = vunpack.c.h.b16 %v579
    %v638 = vunpack.c.l.b16 %v580
    %v639 = vunpack.c.h.b16 %v580
    %v640 = vunpack.c.l.b16 %v581
    %v641 = vunpack.c.h.b16 %v581
    %v642 = vunpack.c.l.b16 %v582
    %v643 = vunpack.c.h.b16 %v582
    %v644 = vunpack.c.l.b16 %v583
    %v645 = vunpack.c.h.b16 %v583
    %v646 = vunpack.c.l.b16 %v584
    %v647 = vunpack.c.h.b16 %v584
    %v648 = vunpack.c.l.b16 %v585
    %v649 = vunpack.c.h.b16 %v585
    %v650 = vunpack.c.l.b16 %v586
    %v651 = vunpack.c.h.b16 %v586
    %v652 = vunpack.c.l.b16 %v587
    %v653 = vunpack.c.h.b16 %v587
    %v654 = vunpack.c.l.b16 %v588
    %v655 = vunpack.c.h.b16 %v588
    %v656 = vunpack.c.l.b16 %v589
    %v657 = vunpack.c.h.b16 %v589
    %v658 = vunpack.c.l.b16 %v590
    %v659 = vunpack.c.h.b16 %v590
    %v660 = vpack.c.b16 %v632, %v628
    %v661 = vpack.c.b16 %v633, %v629
    %v662 = vpack.c.b16 %v634, %v630
    %v663 = vpack.c.b16 %v635, %v631
    %v664 = vpack.c.b16 %v640, %v636
    %v665 = vpack.c.b16 %v641, %v637
    %v666 = vpack.c.b16 %v642, %v638
    %v667 = vpack.c.b16 %v643, %v639
    %v668 = vpack.c.b16 %v648, %v644
    %v669 = vpack.c.b16 %v649, %v645
    %v670 = vpack.c.b16 %v650, %v646
    %v671 = vpack.c.b16 %v651, %v647
    %v672 = vpack.c.b16 %v656, %v652
    %v673 = vpack.c.b16 %v657, %v653
    %v674 = vpack.c.b16 %v658, %v654
    %v675 = vpack.c.b16 %v659, %v655
    %vm692 = vcmask 523264
    %v694 = vsel %vm692, %v574, 0
    %696 = vmatprep.subr.bf16.mxu0 0
    %697 = vmatpush1.bf16.msra.mxu0 0
    %698 = vmatprep.subr.bf16.mxu0 0
    %699 = vmatpush1.bf16.msra.mxu0 0
    %700 = vmatprep.subr.bf16.mxu0 0
    %701 = vmatpush1.bf16.msra.mxu0 0
    %702 = vmatprep.subr.bf16.mxu0 0
    %703 = vmatpush1.bf16.msra.mxu0 0
    %704 = vmatprep.subr.bf16.mxu0 %v673
    %705 = vmatpush1.bf16.msra.mxu0 %v672
    %706 = vmatprep.subr.bf16.mxu0 %v669
    %707 = vmatpush1.bf16.msra.mxu0 %v668
    %708 = vmatprep.subr.bf16.mxu0 %v665
    %709 = vmatpush1.bf16.msra.mxu0 %v664
    %710 = vmatprep.subr.bf16.mxu0 %v661
    %711 = vmatpush1.bf16.msra.mxu0 %v660
    %712 = vmatprep.subr.bf16.mxu0 0
    %713 = vmatpush2.bf16.msra.mxu0 0
    %714 = vmatprep.subr.bf16.mxu0 0
    %715 = vmatpush2.bf16.msra.mxu0 0
    %716 = vmatprep.subr.bf16.mxu0 0
    %717 = vmatpush2.bf16.msra.mxu0 0
    %718 = vmatprep.subr.bf16.mxu0 0
    %719 = vmatpush2.bf16.msra.mxu0 0
    %720 = vmatprep.subr.bf16.mxu0 0
    %721 = vmatpush2.bf16.msra.mxu0 0
    %722 = vmatprep.subr.bf16.mxu0 0
    %723 = vmatpush2.bf16.msra.mxu0 0
    %724 = vmatprep.subr.bf16.mxu0 0
    %725 = vmatpush2.bf16.msra.mxu0 0
    %726 = vmatprep.subr.bf16.mxu0 0
    %727 = vmatpush2.bf16.msra.mxu0 0
    %728 = vmatprep.mubr.bf16.mxu0 0
    %729 = vmatmul.mubr.bf16.gmra.mxu0 %v694
    %v730 = vpop.f32.mrf.mxu0
    %v731 = vadd.f32 %v595, %v730
    %v732 = vpop.f32.mrf.mxu0
    %v733 = vadd.f32 %v599, %v732
    %v734 = vpop.f32.mrf.mxu0
    %v735 = vadd.f32 %v595, %v734
    %v736 = vpop.f32.mrf.mxu0
    %v737 = vadd.f32 %v599, %v736
    %738 = vdwg.mxu0
    %739 = vmatprep.subr.bf16.mxu0 0
    %740 = vmatpush1.bf16.msra.mxu0 0
    %741 = vmatprep.subr.bf16.mxu0 0
    %742 = vmatpush1.bf16.msra.mxu0 0
    %743 = vmatprep.subr.bf16.mxu0 0
    %744 = vmatpush1.bf16.msra.mxu0 0
    %745 = vmatprep.subr.bf16.mxu0 0
    %746 = vmatpush1.bf16.msra.mxu0 0
    %747 = vmatprep.subr.bf16.mxu0 %v675
    %748 = vmatpush1.bf16.msra.mxu0 %v674
    %749 = vmatprep.subr.bf16.mxu0 %v671
    %750 = vmatpush1.bf16.msra.mxu0 %v670
    %751 = vmatprep.subr.bf16.mxu0 %v667
    %752 = vmatpush1.bf16.msra.mxu0 %v666
    %753 = vmatprep.subr.bf16.mxu0 %v663
    %754 = vmatpush1.bf16.msra.mxu0 %v662
    %755 = vmatprep.subr.bf16.mxu0 0
    %756 = vmatpush2.bf16.msra.mxu0 0
    %757 = vmatprep.subr.bf16.mxu0 0
    %758 = vmatpush2.bf16.msra.mxu0 0
    %759 = vmatprep.subr.bf16.mxu0 0
    %760 = vmatpush2.bf16.msra.mxu0 0
    %761 = vmatprep.subr.bf16.mxu0 0
    %762 = vmatpush2.bf16.msra.mxu0 0
    %763 = vmatprep.subr.bf16.mxu0 0
    %764 = vmatpush2.bf16.msra.mxu0 0
    %765 = vmatprep.subr.bf16.mxu0 0
    %766 = vmatpush2.bf16.msra.mxu0 0
    %767 = vmatprep.subr.bf16.mxu0 0
    %768 = vmatpush2.bf16.msra.mxu0 0
    %769 = vmatprep.subr.bf16.mxu0 0
    %770 = vmatpush2.bf16.msra.mxu0 0
    %771 = vmatprep.mubr.bf16.mxu0 0
    %772 = vmatmul.mubr.bf16.gmra.mxu0 %v694
    %v773 = vpop.f32.mrf.mxu0
    %v774 = vadd.f32 %v603, %v773
    %v775 = vpop.f32.mrf.mxu0
    %v776 = vadd.f32 %v607, %v775
    %v777 = vpop.f32.mrf.mxu0
    %v778 = vadd.f32 %v603, %v777
    %v779 = vpop.f32.mrf.mxu0
    %v780 = vadd.f32 %v607, %v779
    %781 = vdwg.mxu0
    %v782 = vmul.f32 %v731, 0.5
    %v783 = vmul.f32 %v733, 0.5
    %v784 = vmul.f32 %v774, 0.5
    %v785 = vmul.f32 %v776, 0.5
    %v786 = vmul.f32 %v735, 0.5
    %v787 = vmul.f32 %v737, 0.5
    %v788 = vmul.f32 %v778, 0.5
    %v789 = vmul.f32 %v780, 0.5
    %v790 = vmul.f32 %v731, 0.70710677
    %v791 = vmul.f32 %v733, 0.70710677
    %v792 = vmul.f32 %v774, 0.70710677
    %v793 = vmul.f32 %v776, 0.70710677
    %v794 = vmul.f32 %v735, 0.70710677
    %v795 = vmul.f32 %v737, 0.70710677
    %v796 = vmul.f32 %v778, 0.70710677
    %v797 = vmul.f32 %v780, 0.70710677
    %v798 = verf.f32.pop %v790
    %v799 = verf.f32.pop %v791
    %v800 = verf.f32.pop %v792
    %v801 = verf.f32.pop %v793
    %v802 = verf.f32.pop %v794
    %v803 = verf.f32.pop %v795
    %v804 = verf.f32.pop %v796
    %v805 = verf.f32.pop %v797
    %v806 = vadd.f32 %v798, 1.0
    %v807 = vadd.f32 %v799, 1.0
    %v808 = vadd.f32 %v800, 1.0
    %v809 = vadd.f32 %v801, 1.0
    %v810 = vadd.f32 %v802, 1.0
    %v811 = vadd.f32 %v803, 1.0
    %v812 = vadd.f32 %v804, 1.0
    %v813 = vadd.f32 %v805, 1.0
    %v814 = vmul.f32 %v782, %v806
    %v815 = vmul.f32 %v783, %v807
    %v816 = vmul.f32 %v784, %v808
    %v817 = vmul.f32 %v785, %v809
    %v818 = vmul.f32 %v786, %v810
    %v819 = vmul.f32 %v787, %v811
    %v820 = vmul.f32 %v788, %v812
    %v821 = vmul.f32 %v789, %v813
    %v822 = vadd.f32 %v814, %v815
    %v823 = vadd.f32 %v822, %v816
    %v824 = vadd.f32 %v823, %v817
    %825 = vadd.xlane.f32.xlu0 %v824
    %v826 = vpop.xlane.xlu0 %825
    %v827 = vadd.f32 %v818, %v819
    %v828 = vadd.f32 %v827, %v820
    %v829 = vadd.f32 %v828, %v821
    %830 = vadd.xlane.f32.xlu0 %v829
    %v831 = vpop.xlane.xlu0 %830
    %v832 = vrcp.pop 512.0
    %v833 = vmul.f32 %v826, %v832
    %v834 = vmul.f32 %v831, %v832
    %v835 = vsub.f32 %v814, %v833
    %v836 = vsub.f32 %v815, %v833
    %v837 = vsub.f32 %v816, %v833
    %v838 = vsub.f32 %v817, %v833
    %v839 = vsub.f32 %v818, %v834
    %v840 = vsub.f32 %v819, %v834
    %v841 = vsub.f32 %v820, %v834
    %v842 = vsub.f32 %v821, %v834
    %v843 = vmul.f32 %v835, %v835
    %v844 = vmul.f32 %v836, %v836
    %v845 = vmul.f32 %v837, %v837
    %v846 = vmul.f32 %v838, %v838
    %v847 = vmul.f32 %v839, %v839
    %v848 = vmul.f32 %v840, %v840
    %v849 = vmul.f32 %v841, %v841
    %v850 = vmul.f32 %v842, %v842
    %v851 = vadd.f32 %v843, %v844
    %v852 = vadd.f32 %v851, %v845
    %v853 = vadd.f32 %v852, %v846
    %854 = vadd.xlane.f32.xlu0 %v853
    %v855 = vpop.xlane.xlu0 %854
    %v856 = vadd.f32 %v847, %v848
    %v857 = vadd.f32 %v856, %v849
    %v858 = vadd.f32 %v857, %v850
    %859 = vadd.xlane.f32.xlu0 %v858
    %v860 = vpop.xlane.xlu0 %859
    %v861 = vmul.f32 %v855, %v832
    %v862 = vmul.f32 %v860, %v832
    %v863 = vadd.f32 %v861, 1e-05
    %v864 = vadd.f32 %v862, 1e-05
    %v865 = vrsqrt.pop %v863
    %v866 = vrsqrt.pop %v864
    %v867 = vmul.f32 %v835, %v865
    %v868 = vmul.f32 %v836, %v865
    %v869 = vmul.f32 %v837, %v865
    %v870 = vmul.f32 %v838, %v865
    %v871 = vmul.f32 %v839, %v866
    %v872 = vmul.f32 %v840, %v866
    %v873 = vmul.f32 %v841, %v866
    %v874 = vmul.f32 %v842, %v866
    %v876 = vlaneseq
    %v877 = vshrl.u32 %v876, 7
    %v878 = vsub.s32 0, %v877
    %v879 = vrot.slane %v31, %v878
    %v880 = vlaneseq
    %v881 = vshrl.u32 %v880, 7
    %v882 = vsub.s32 1, %v881
    %v883 = vrot.slane %v31, %v882
    %v884 = vlaneseq
    %v885 = vshrl.u32 %v884, 7
    %v886 = vsub.s32 2, %v885
    %v887 = vrot.slane %v31, %v886
    %v888 = vlaneseq
    %v889 = vshrl.u32 %v888, 7
    %v890 = vsub.s32 3, %v889
    %v891 = vrot.slane %v31, %v890
    %v896 = vmul.f32 %v867, %v879
    %v897 = vmul.f32 %v868, %v883
    %v898 = vmul.f32 %v869, %v887
    %v899 = vmul.f32 %v870, %v891
    %v900 = vmul.f32 %v871, %v879
    %v901 = vmul.f32 %v872, %v883
    %v902 = vmul.f32 %v873, %v887
    %v903 = vmul.f32 %v874, %v891
    %v905 = vlaneseq
    %v906 = vshrl.u32 %v905, 7
    %v907 = vsub.s32 0, %v906
    %v908 = vrot.slane %v33, %v907
    %v909 = vlaneseq
    %v910 = vshrl.u32 %v909, 7
    %v911 = vsub.s32 1, %v910
    %v912 = vrot.slane %v33, %v911
    %v913 = vlaneseq
    %v914 = vshrl.u32 %v913, 7
    %v915 = vsub.s32 2, %v914
    %v916 = vrot.slane %v33, %v915
    %v917 = vlaneseq
    %v918 = vshrl.u32 %v917, 7
    %v919 = vsub.s32 3, %v918
    %v920 = vrot.slane %v33, %v919
    %v925 = vadd.f32 %v896, %v908
    %v926 = vadd.f32 %v897, %v912
    %v927 = vadd.f32 %v898, %v916
    %v928 = vadd.f32 %v899, %v920
    %v929 = vadd.f32 %v900, %v908
    %v930 = vadd.f32 %v901, %v912
    %v931 = vadd.f32 %v902, %v916
    %v932 = vadd.f32 %v903, %v920
    %v933 = vpack.c.bf16 %v929, %v925
    %v934 = vpack.c.bf16 %v930, %v926
    %v935 = vpack.c.bf16 %v931, %v927
    %v936 = vpack.c.bf16 %v932, %v928
    %v937 = vld [vmem:[%s4] sm:$0xf]
    %v938 = vld [vmem:[%s4 + $0x4] sm:$0xf]
    %v939 = vld [vmem:[%s4 + $0x8] sm:$0xf]
    %v940 = vld [vmem:[%s4 + $0xc] sm:$0xf]
    %v941 = vld [vmem:[%s4 + $0x10] sm:$0xf]
    %v942 = vld [vmem:[%s4 + $0x14] sm:$0xf]
    %v943 = vld [vmem:[%s4 + $0x18] sm:$0xf]
    %v944 = vld [vmem:[%s4 + $0x1c] sm:$0xf]
    %v945 = vld [vmem:[%s4 + $0x20] sm:$0xf]
    %v946 = vld [vmem:[%s4 + $0x24] sm:$0xf]
    %v947 = vld [vmem:[%s4 + $0x28] sm:$0xf]
    %v948 = vld [vmem:[%s4 + $0x2c] sm:$0xf]
    %v949 = vld [vmem:[%s4 + $0x30] sm:$0xf]
    %v950 = vld [vmem:[%s4 + $0x34] sm:$0xf]
    %v951 = vld [vmem:[%s4 + $0x38] sm:$0xf]
    %v952 = vld [vmem:[%s4 + $0x3c] sm:$0xf]
    %v953 = vld [vmem:[%s4 + $0x40] sm:$0xf]
    %v954 = vld [vmem:[%s4 + $0x44] sm:$0xf]
    %v955 = vld [vmem:[%s4 + $0x48] sm:$0xf]
    %v956 = vld [vmem:[%s4 + $0x4c] sm:$0xf]
    %v957 = vld [vmem:[%s4 + $0x50] sm:$0xf]
    %v958 = vld [vmem:[%s4 + $0x54] sm:$0xf]
    %v959 = vld [vmem:[%s4 + $0x58] sm:$0xf]
    %v960 = vld [vmem:[%s4 + $0x5c] sm:$0xf]
    %v961 = vld [vmem:[%s4 + $0x60] sm:$0xf]
    %v962 = vld [vmem:[%s4 + $0x64] sm:$0xf]
    %v963 = vld [vmem:[%s4 + $0x68] sm:$0xf]
    %v964 = vld [vmem:[%s4 + $0x6c] sm:$0xf]
    %v965 = vld [vmem:[%s4 + $0x70] sm:$0xf]
    %v966 = vld [vmem:[%s4 + $0x74] sm:$0xf]
    %v967 = vld [vmem:[%s4 + $0x78] sm:$0xf]
    %v968 = vld [vmem:[%s4 + $0x7c] sm:$0xf]
    %v969 = vld [vmem:[%s4 + $0x80] sm:$0xf]
    %v970 = vld [vmem:[%s4 + $0x84] sm:$0xf]
    %v971 = vld [vmem:[%s4 + $0x88] sm:$0xf]
    %v972 = vld [vmem:[%s4 + $0x8c] sm:$0xf]
    %v973 = vld [vmem:[%s4 + $0x90] sm:$0xf]
    %v974 = vld [vmem:[%s4 + $0x94] sm:$0xf]
    %v975 = vld [vmem:[%s4 + $0x98] sm:$0xf]
    %v976 = vld [vmem:[%s4 + $0x9c] sm:$0xf]
    %v977 = vld [vmem:[%s4 + $0xa0] sm:$0xf]
    %v978 = vld [vmem:[%s4 + $0xa4] sm:$0xf]
    %v979 = vld [vmem:[%s4 + $0xa8] sm:$0xf]
    %v980 = vld [vmem:[%s4 + $0xac] sm:$0xf]
    %v981 = vld [vmem:[%s4 + $0xb0] sm:$0xf]
    %v982 = vld [vmem:[%s4 + $0xb4] sm:$0xf]
    %v983 = vld [vmem:[%s4 + $0xb8] sm:$0xf]
    %v984 = vld [vmem:[%s4 + $0xbc] sm:$0xf]
    %v985 = vld [vmem:[%s4 + $0xc0] sm:$0xf]
    %v986 = vld [vmem:[%s4 + $0xc4] sm:$0xf]
    %v987 = vld [vmem:[%s4 + $0xc8] sm:$0xf]
    %v988 = vld [vmem:[%s4 + $0xcc] sm:$0xf]
    %v989 = vld [vmem:[%s4 + $0xd0] sm:$0xf]
    %v990 = vld [vmem:[%s4 + $0xd4] sm:$0xf]
    %v991 = vld [vmem:[%s4 + $0xd8] sm:$0xf]
    %v992 = vld [vmem:[%s4 + $0xdc] sm:$0xf]
    %v993 = vld [vmem:[%s4 + $0xe0] sm:$0xf]
    %v994 = vld [vmem:[%s4 + $0xe4] sm:$0xf]
    %v995 = vld [vmem:[%s4 + $0xe8] sm:$0xf]
    %v996 = vld [vmem:[%s4 + $0xec] sm:$0xf]
    %v997 = vld [vmem:[%s4 + $0xf0] sm:$0xf]
    %v998 = vld [vmem:[%s4 + $0xf4] sm:$0xf]
    %v999 = vld [vmem:[%s4 + $0xf8] sm:$0xf]
    %v1000 = vld [vmem:[%s4 + $0xfc] sm:$0xf]
    %v1065 = vunpack.c.l.b16 %v937
    %v1066 = vunpack.c.l.b16 %v938
    %v1067 = vunpack.c.l.b16 %v939
    %v1068 = vunpack.c.l.b16 %v940
    %v1069 = vunpack.c.l.b16 %v941
    %v1070 = vunpack.c.l.b16 %v942
    %v1071 = vunpack.c.l.b16 %v943
    %v1072 = vunpack.c.l.b16 %v944
    %v1073 = vunpack.c.l.b16 %v945
    %v1074 = vunpack.c.l.b16 %v946
    %v1075 = vunpack.c.l.b16 %v947
    %v1076 = vunpack.c.l.b16 %v948
    %v1077 = vunpack.c.l.b16 %v949
    %v1078 = vunpack.c.l.b16 %v950
    %v1079 = vunpack.c.l.b16 %v951
    %v1080 = vunpack.c.l.b16 %v952
    %v1081 = vunpack.c.l.b16 %v953
    %v1082 = vunpack.c.l.b16 %v954
    %v1083 = vunpack.c.l.b16 %v955
    %v1084 = vunpack.c.l.b16 %v956
    %v1085 = vunpack.c.l.b16 %v957
    %v1086 = vunpack.c.l.b16 %v958
    %v1087 = vunpack.c.l.b16 %v959
    %v1088 = vunpack.c.l.b16 %v960
    %v1089 = vunpack.c.l.b16 %v961
    %v1090 = vunpack.c.l.b16 %v962
    %v1091 = vunpack.c.l.b16 %v963
    %v1092 = vunpack.c.l.b16 %v964
    %v1093 = vunpack.c.l.b16 %v965
    %v1094 = vunpack.c.l.b16 %v966
    %v1095 = vunpack.c.l.b16 %v967
    %v1096 = vunpack.c.l.b16 %v968
    %v1097 = vunpack.c.l.b16 %v969
    %v1098 = vunpack.c.l.b16 %v970
    %v1099 = vunpack.c.l.b16 %v971
    %v1100 = vunpack.c.l.b16 %v972
    %v1101 = vunpack.c.l.b16 %v973
    %v1102 = vunpack.c.l.b16 %v974
    %v1103 = vunpack.c.l.b16 %v975
    %v1104 = vunpack.c.l.b16 %v976
    %v1105 = vunpack.c.l.b16 %v977
    %v1106 = vunpack.c.l.b16 %v978
    %v1107 = vunpack.c.l.b16 %v979
    %v1108 = vunpack.c.l.b16 %v980
    %v1109 = vunpack.c.l.b16 %v981
    %v1110 = vunpack.c.l.b16 %v982
    %v1111 = vunpack.c.l.b16 %v983
    %v1112 = vunpack.c.l.b16 %v984
    %v1113 = vunpack.c.l.b16 %v985
    %v1114 = vunpack.c.l.b16 %v986
    %v1115 = vunpack.c.l.b16 %v987
    %v1116 = vunpack.c.l.b16 %v988
    %v1117 = vunpack.c.l.b16 %v989
    %v1118 = vunpack.c.l.b16 %v990
    %v1119 = vunpack.c.l.b16 %v991
    %v1120 = vunpack.c.l.b16 %v992
    %v1121 = vunpack.c.l.b16 %v993
    %v1122 = vunpack.c.l.b16 %v994
    %v1123 = vunpack.c.l.b16 %v995
    %v1124 = vunpack.c.l.b16 %v996
    %v1125 = vunpack.c.l.b16 %v997
    %v1126 = vunpack.c.l.b16 %v998
    %v1127 = vunpack.c.l.b16 %v999
    %v1128 = vunpack.c.l.b16 %v1000
    %v1129 = vpack.c.b16 %v1066, %v1065
    %v1130 = vpack.c.b16 %v1068, %v1067
    %v1131 = vpack.c.b16 %v1070, %v1069
    %v1132 = vpack.c.b16 %v1072, %v1071
    %v1133 = vpack.c.b16 %v1074, %v1073
    %v1134 = vpack.c.b16 %v1076, %v1075
    %v1135 = vpack.c.b16 %v1078, %v1077
    %v1136 = vpack.c.b16 %v1080, %v1079
    %v1137 = vpack.c.b16 %v1082, %v1081
    %v1138 = vpack.c.b16 %v1084, %v1083
    %v1139 = vpack.c.b16 %v1086, %v1085
    %v1140 = vpack.c.b16 %v1088, %v1087
    %v1141 = vpack.c.b16 %v1090, %v1089
    %v1142 = vpack.c.b16 %v1092, %v1091
    %v1143 = vpack.c.b16 %v1094, %v1093
    %v1144 = vpack.c.b16 %v1096, %v1095
    %v1145 = vpack.c.b16 %v1098, %v1097
    %v1146 = vpack.c.b16 %v1100, %v1099
    %v1147 = vpack.c.b16 %v1102, %v1101
    %v1148 = vpack.c.b16 %v1104, %v1103
    %v1149 = vpack.c.b16 %v1106, %v1105
    %v1150 = vpack.c.b16 %v1108, %v1107
    %v1151 = vpack.c.b16 %v1110, %v1109
    %v1152 = vpack.c.b16 %v1112, %v1111
    %v1153 = vpack.c.b16 %v1114, %v1113
    %v1154 = vpack.c.b16 %v1116, %v1115
    %v1155 = vpack.c.b16 %v1118, %v1117
    %v1156 = vpack.c.b16 %v1120, %v1119
    %v1157 = vpack.c.b16 %v1122, %v1121
    %v1158 = vpack.c.b16 %v1124, %v1123
    %v1159 = vpack.c.b16 %v1126, %v1125
    %v1160 = vpack.c.b16 %v1128, %v1127
    %1193 = vmatprep.subr.bf16.mxu0 0
    %1194 = vmatpush1.bf16.msra.mxu0 %v1136
    %1195 = vmatprep.subr.bf16.mxu0 0
    %1196 = vmatpush1.bf16.msra.mxu0 %v1135
    %1197 = vmatprep.subr.bf16.mxu0 0
    %1198 = vmatpush1.bf16.msra.mxu0 %v1134
    %1199 = vmatprep.subr.bf16.mxu0 0
    %1200 = vmatpush1.bf16.msra.mxu0 %v1133
    %1201 = vmatprep.subr.bf16.mxu0 0
    %1202 = vmatpush1.bf16.msra.mxu0 %v1132
    %1203 = vmatprep.subr.bf16.mxu0 0
    %1204 = vmatpush1.bf16.msra.mxu0 %v1131
    %1205 = vmatprep.subr.bf16.mxu0 0
    %1206 = vmatpush1.bf16.msra.mxu0 %v1130
    %1207 = vmatprep.subr.bf16.mxu0 0
    %1208 = vmatpush1.bf16.msra.mxu0 %v1129
    %1209 = vmatprep.subr.bf16.mxu0 0
    %1210 = vmatpush2.bf16.msra.mxu0 %v1144
    %1211 = vmatprep.subr.bf16.mxu0 0
    %1212 = vmatpush2.bf16.msra.mxu0 %v1143
    %1213 = vmatprep.subr.bf16.mxu0 0
    %1214 = vmatpush2.bf16.msra.mxu0 %v1142
    %1215 = vmatprep.subr.bf16.mxu0 0
    %1216 = vmatpush2.bf16.msra.mxu0 %v1141
    %1217 = vmatprep.subr.bf16.mxu0 0
    %1218 = vmatpush2.bf16.msra.mxu0 %v1140
    %1219 = vmatprep.subr.bf16.mxu0 0
    %1220 = vmatpush2.bf16.msra.mxu0 %v1139
    %1221 = vmatprep.subr.bf16.mxu0 0
    %1222 = vmatpush2.bf16.msra.mxu0 %v1138
    %1223 = vmatprep.subr.bf16.mxu0 0
    %1224 = vmatpush2.bf16.msra.mxu0 %v1137
    %1225 = vmatprep.mubr.bf16.mxu0 %v934
    %1226 = vmatmul.mubr.bf16.gmra.mxu0 %v933
    %v1227 = vpop.f32.mrf.mxu0
    %v1228 = vadd.f32 %v25, %v1227
    %v1229 = vpop.f32.mrf.mxu0
    %v1230 = vpop.f32.mrf.mxu0
    %v1231 = vadd.f32 %v25, %v1230
    %v1232 = vpop.f32.mrf.mxu0
    %1233 = vdwg.mxu0
    %1234 = vmatprep.subr.bf16.mxu0 0
    %1235 = vmatpush1.bf16.msra.mxu0 %v1152
    %1236 = vmatprep.subr.bf16.mxu0 0
    %1237 = vmatpush1.bf16.msra.mxu0 %v1151
    %1238 = vmatprep.subr.bf16.mxu0 0
    %1239 = vmatpush1.bf16.msra.mxu0 %v1150
    %1240 = vmatprep.subr.bf16.mxu0 0
    %1241 = vmatpush1.bf16.msra.mxu0 %v1149
    %1242 = vmatprep.subr.bf16.mxu0 0
    %1243 = vmatpush1.bf16.msra.mxu0 %v1148
    %1244 = vmatprep.subr.bf16.mxu0 0
    %1245 = vmatpush1.bf16.msra.mxu0 %v1147
    %1246 = vmatprep.subr.bf16.mxu0 0
    %1247 = vmatpush1.bf16.msra.mxu0 %v1146
    %1248 = vmatprep.subr.bf16.mxu0 0
    %1249 = vmatpush1.bf16.msra.mxu0 %v1145
    %1250 = vmatprep.subr.bf16.mxu0 0
    %1251 = vmatpush2.bf16.msra.mxu0 %v1160
    %1252 = vmatprep.subr.bf16.mxu0 0
    %1253 = vmatpush2.bf16.msra.mxu0 %v1159
    %1254 = vmatprep.subr.bf16.mxu0 0
    %1255 = vmatpush2.bf16.msra.mxu0 %v1158
    %1256 = vmatprep.subr.bf16.mxu0 0
    %1257 = vmatpush2.bf16.msra.mxu0 %v1157
    %1258 = vmatprep.subr.bf16.mxu0 0
    %1259 = vmatpush2.bf16.msra.mxu0 %v1156
    %1260 = vmatprep.subr.bf16.mxu0 0
    %1261 = vmatpush2.bf16.msra.mxu0 %v1155
    %1262 = vmatprep.subr.bf16.mxu0 0
    %1263 = vmatpush2.bf16.msra.mxu0 %v1154
    %1264 = vmatprep.subr.bf16.mxu0 0
    %1265 = vmatpush2.bf16.msra.mxu0 %v1153
    %1266 = vmatprep.mubr.bf16.mxu0 %v936
    %1267 = vmatmul.mubr.bf16.gmra.mxu0 %v935
    %v1268 = vpop.f32.mrf.mxu0
    %v1269 = vadd.f32 %v1228, %v1268
    %v1270 = vpop.f32.mrf.mxu0
    %v1271 = vpop.f32.mrf.mxu0
    %v1272 = vadd.f32 %v1231, %v1271
    %v1273 = vpop.f32.mrf.mxu0
    %1274 = vdwg.mxu0
    %v1275 = vsel %vm692, %v1269, 0.0
    %1276 = vadd.xlane.f32.xlu0 %v1275
    %v1277 = vpop.xlane.xlu0 %1276
    %v1278 = vsel %vm692, %v1272, 0.0
    %1279 = vadd.xlane.f32.xlu0 %v1278
    %v1280 = vpop.xlane.xlu0 %1279
    %v1281 = vrcp.pop 64.0
    %v1282 = vmul.f32 %v1277, %v1281
    %v1283 = vmul.f32 %v1280, %v1281
    %v1284 = vsub.f32 %v1269, %v1282
    %v1285 = vsub.f32 %v1272, %v1283
    %v1286 = vmul.f32 %v1284, %v1284
    %v1287 = vmul.f32 %v1285, %v1285
    %v1288 = vsel %vm692, %v1286, 0.0
    %1289 = vadd.xlane.f32.xlu0 %v1288
    %v1290 = vpop.xlane.xlu0 %1289
    %v1291 = vsel %vm692, %v1287, 0.0
    %1292 = vadd.xlane.f32.xlu0 %v1291
    %v1293 = vpop.xlane.xlu0 %1292
    %v1294 = vmul.f32 %v1290, %v1281
    %v1295 = vmul.f32 %v1293, %v1281
    %v1296 = vadd.f32 %v1294, 1e-05
    %v1297 = vadd.f32 %v1295, 1e-05
    %v1298 = vrsqrt.pop %v1296
    %v1299 = vrsqrt.pop %v1297
    %v1300 = vmul.f32 %v1284, %v1298
    %v1301 = vmul.f32 %v1285, %v1299
    %v1302 = vmul.f32 %v1300, %v26
    %v1303 = vmul.f32 %v1301, %v26
    %v1304 = vadd.f32 %v1302, %v27
    %v1305 = vadd.f32 %v1303, %v27
    %1306 = vst.msk [vmem:[#allocation2] sm:$0xff] %vm692, %v1304
    %1307 = vst.msk [vmem:[#allocation2 + $0x8] sm:$0xff] %vm692, %v1305
    // Predicated region
    $region22: #{tpu_custom_call.1} parent=1 // pred_check
      _
    $region23: #{tpu_custom_call.1} parent=1 // pred_check_branch
      %1309 = sbr.rel (0) target = $region25
    $region24: #{tpu_custom_call.1} parent=1 // pred_region
      %s1311 = ssub.s32 256, 256
      %1312 = vsyncadd [#allocation3], %s1311
      %s1313 = sshll.u32 [#allocation2], 4
      %s1314 = int_to_ptr.vmem [resolvable:$true] %s1313
      %1319 = dma.vmem_to_hbm [thread:$0]  %s1314, 256, %s5, [#allocation3], 128, 128, 8
    $region25: #{tpu_custom_call.1} parent=1 // pred_fallthru
      _
    // Predicated region
    $region26: #{tpu_custom_call.1} parent=1 // pred_check
      _
    $region27: #{tpu_custom_call.1} parent=1 // pred_check_branch
      %1321 = sbr.rel (0) target = $region29
    $region28: #{tpu_custom_call.1} parent=1 // pred_region
      %1322 = dma.done [#allocation3], 256
    $region29: #{tpu_custom_call.1} parent=1 // pred_fallthru
      _
    %1323 = vsyncpa [#allocation3], 1

</llo_original>
